<compile_context>
chip_gen: v6e
topology: v6e:2x2x1
jax: 0.10.0
libtpu: 0.0.40
codegen_flags: <defaults>
</compile_context>

<pallas_src>
import math
from functools import partial

import jax
import jax.numpy as jnp
from jax.experimental import pallas as pl
from jax.experimental.pallas import tpu as pltpu


def encoder_layer_kernel(
    x_ref,            # (BB*S, D)  f32 activations
    wqkv_ref,         # (D, 3D)    bf16, pre-transposed
    bqkv_ref,         # (1, 3D)    f32
    wo_ref,           # (D, D)     bf16, pre-transposed
    bo_ref,           # (1, D)     f32
    g1_ref, bt1_ref,  # (1, D)     f32  -- LayerNorm1 weight / bias
    w1_ref,           # (D, dff)   bf16, pre-transposed
    bf1_ref,          # (1, dff)   f32
    w2_ref,           # (dff, D)   bf16, pre-transposed
    bf2_ref,          # (1, D)     f32
    g2_ref, bt2_ref,  # (1, D)     f32  -- LayerNorm2 weight / bias
    out_ref,          # (BB*S, D)  f32
    *, batch, nhead, eps, mm_dtype):
    x = x_ref[...]                         # (R, D), R = BB*S
    R, D = x.shape
    S = R // batch
    dh = D // nhead
    scale = 1.0 / math.sqrt(dh)

    # ---- self-attention ----------------------------------------------------
    # QKV projection on the MXU (bf16 operands, f32 accumulate).
    qkv = jnp.dot(x.astype(mm_dtype), wqkv_ref[...],
                  preferred_element_type=jnp.float32) + bqkv_ref[...]
    q = qkv[:, :D].reshape(batch, S, D)
    k = qkv[:, D:2 * D].reshape(batch, S, D)
    v = qkv[:, 2 * D:].reshape(batch, S, D)

    head_outs = []
    for h in range(nhead):                 # static unrolled head loop
        sl = slice(h * dh, (h + 1) * dh)
        qh = q[:, :, sl].astype(mm_dtype)  # (BB, S, dh)
        kh = k[:, :, sl].astype(mm_dtype)
        vh = v[:, :, sl].astype(mm_dtype)
        # scores batched over B (single batched MXU push per head).
        s = jnp.einsum("bqd,bkd->bqk", qh, kh,
                       preferred_element_type=jnp.float32) * scale
        s = s - jnp.max(s, axis=-1, keepdims=True)
        p = jnp.exp(s)
        p = p * pl.reciprocal(jnp.sum(p, axis=-1, keepdims=True), approx=True)
        head_outs.append(
            jnp.einsum("bqk,bkd->bqd", p.astype(mm_dtype), vh,
                       preferred_element_type=jnp.float32))
    # Merge heads in registers (no scratch round-trip), then output proj.
    attn = jnp.concatenate(head_outs, axis=-1).reshape(R, D)
    attn = jnp.dot(attn.astype(mm_dtype), wo_ref[...],
                   preferred_element_type=jnp.float32) + bo_ref[...]

    # ---- residual + LayerNorm1 (f32; dropout == identity) -------------------
    y = x + attn
    mu = jnp.mean(y, axis=-1, keepdims=True)
    var = jnp.mean((y - mu) ** 2, axis=-1, keepdims=True)
    y = (y - mu) * jax.lax.rsqrt(var + eps) * g1_ref[...] + bt1_ref[...]

    # ---- feed-forward (relu) ------------------------------------------------
    h1 = jnp.dot(y.astype(mm_dtype), w1_ref[...],
                 preferred_element_type=jnp.float32) + bf1_ref[...]
    h1 = jnp.maximum(h1, 0.0)
    h2 = jnp.dot(h1.astype(mm_dtype), w2_ref[...],
                 preferred_element_type=jnp.float32) + bf2_ref[...]

    # ---- residual + LayerNorm2 ----------------------------------------------
    z = y + h2
    mu2 = jnp.mean(z, axis=-1, keepdims=True)
    var2 = jnp.mean((z - mu2) ** 2, axis=-1, keepdims=True)
    out_ref[...] = (z - mu2) * jax.lax.rsqrt(var2 + eps) * g2_ref[...] \
        + bt2_ref[...]


def transformer_forward(x, params, *, nhead=4, eps=1e-5, batch_block=None,
                        mm_dtype=jnp.bfloat16):
    B, S, D = x.shape
    dff = params["w1"].shape[0]
    bb = B if batch_block is None else batch_block
    assert B % bb == 0, "batch_block must divide B"
    rows = bb * S

    # One-time wrapper-side prep: transpose weights to x-major and cast the
    # MXU operands to bf16 (biases / LN params stay f32).
    wqkv_t = params["wqkv"].T.astype(mm_dtype)   # (D, 3D)
    wo_t = params["wo"].T.astype(mm_dtype)       # (D, D)
    w1_t = params["w1"].T.astype(mm_dtype)       # (D, dff)
    w2_t = params["w2"].T.astype(mm_dtype)       # (dff, D)

    x2 = x.reshape(B * S, D)                     # flatten batch into rows

    def wspec(shape):
        n = len(shape)
        return pl.BlockSpec(shape, lambda i: (0,) * n)  # grid-invariant block

    kernel = partial(encoder_layer_kernel, batch=bb, nhead=nhead, eps=eps,
                     mm_dtype=mm_dtype)

    out2 = pl.pallas_call(
        kernel,
        out_shape=jax.ShapeDtypeStruct((B * S, D), jnp.float32),
        grid_spec=pltpu.PrefetchScalarGridSpec(
            num_scalar_prefetch=0,
            grid=(B // bb,),
            in_specs=[
                pl.BlockSpec((rows, D), lambda i: (i, 0)),       # x slab
                wspec((D, 3 * D)), wspec((1, 3 * D)),            # Wqkv^T, bqkv
                wspec((D, D)), wspec((1, D)),                    # Wo^T, bo
                wspec((1, D)), wspec((1, D)),                    # LN1 gamma, beta
                wspec((D, dff)), wspec((1, dff)),                # W1^T, b1
                wspec((dff, D)), wspec((1, D)),                  # W2^T, b2
                wspec((1, D)), wspec((1, D)),                    # LN2 gamma, beta
            ],
            out_specs=pl.BlockSpec((rows, D), lambda i: (i, 0)),
        ),
        compiler_params=pltpu.CompilerParams(
            dimension_semantics=("parallel",)),   # batch blocks are independent
    )(x2, wqkv_t, params["bqkv"], wo_t, params["bo"],
      params["g1"], params["bt1"], w1_t, params["bf1"],
      w2_t, params["bf2"], params["g2"], params["bt2"])
    return out2.reshape(B, S, D)


def reference_forward(x, params, *, nhead=4, eps=1e-5):
    """Pure-JAX f32 reference of the same PyTorch encoder layer (eval mode)."""
    B, S, D = x.shape
    dh = D // nhead
    qkv = x @ params["wqkv"].T + params["bqkv"][0]
    q, k, v = qkv[..., :D], qkv[..., D:2 * D], qkv[..., 2 * D:]

    def heads(t):
        return t.reshape(B, S, nhead, dh).transpose(0, 2, 1, 3)

    qh, kh, vh = heads(q), heads(k), heads(v)
    s = jnp.einsum("bhqd,bhkd->bhqk", qh, kh) / math.sqrt(dh)
    p = jax.nn.softmax(s, axis=-1)
    a = jnp.einsum("bhqk,bhkd->bhqd", p, vh).transpose(0, 2, 1, 3)
    a = a.reshape(B, S, D) @ params["wo"].T + params["bo"][0]

    def ln(t, g, b):
        mu = t.mean(-1, keepdims=True)
        var = ((t - mu) ** 2).mean(-1, keepdims=True)
        return (t - mu) / jnp.sqrt(var + eps) * g[0] + b[0]

    y = ln(x + a, params["g1"], params["bt1"])
    h = jax.nn.relu(y @ params["w1"].T + params["bf1"][0])
    h = h @ params["w2"].T + params["bf2"][0]
    return ln(y + h, params["g2"], params["bt2"])


def init_params(key, d_model, nhead, dff):
    ks = jax.random.split(key, 6)
    std = 0.02
    return {
        "wqkv": std * jax.random.normal(ks[0], (3 * d_model, d_model), jnp.float32),
        "bqkv": jnp.zeros((1, 3 * d_model), jnp.float32),
        "wo":   std * jax.random.normal(ks[1], (d_model, d_model), jnp.float32),
        "bo":   jnp.zeros((1, d_model), jnp.float32),
        "g1":   jnp.ones((1, d_model), jnp.float32),
        "bt1":  jnp.zeros((1, d_model), jnp.float32),
        "w1":   std * jax.random.normal(ks[2], (dff, d_model), jnp.float32),
        "bf1":  0.01 * jax.random.normal(ks[3], (1, dff), jnp.float32),
        "w2":   std * jax.random.normal(ks[4], (d_model, dff), jnp.float32),
        "bf2":  0.01 * jax.random.normal(ks[5], (1, d_model), jnp.float32),
        "g2":   jnp.ones((1, d_model), jnp.float32),
        "bt2":  jnp.zeros((1, d_model), jnp.float32),
    }


if __name__ == "__main__":
    B, S, D = 2, 8, 32          # batch, seq, d_model
    NHEAD, DFF = 4, 64

    key = jax.random.PRNGKey(0)
    kx, kp = jax.random.split(key)
    x = jax.random.normal(kx, (B, S, D), jnp.float32)
    params = init_params(kp, D, NHEAD, DFF)

    out = transformer_forward(x, params, nhead=NHEAD)
    out = jax.block_until_ready(out)

    ref = reference_forward(x, params, nhead=NHEAD)
    assert out.shape == (B, S, D)
    # bf16 MXU operands with f32 accumulation vs. the pure-f32 reference.
    err = float(jnp.max(jnp.abs(out - ref)))
    assert jnp.allclose(out, ref, rtol=2e-2, atol=2e-2), f"max abs diff {err}"

    print("KERNEL_OK")
</pallas_src>

<mosaic_0001>
module attributes {stable_mosaic.version = 11 : i64} {
  func.func @encoder_layer_kernel(%arg0: i32, %arg1: memref<16x32xf32, #tpu.memory_space<vmem>>, %arg2: memref<32x96xbf16, #tpu.memory_space<vmem>>, %arg3: memref<1x96xf32, #tpu.memory_space<vmem>>, %arg4: memref<32x32xbf16, #tpu.memory_space<vmem>>, %arg5: memref<1x32xf32, #tpu.memory_space<vmem>>, %arg6: memref<1x32xf32, #tpu.memory_space<vmem>>, %arg7: memref<1x32xf32, #tpu.memory_space<vmem>>, %arg8: memref<32x64xbf16, #tpu.memory_space<vmem>>, %arg9: memref<1x64xf32, #tpu.memory_space<vmem>>, %arg10: memref<64x32xbf16, #tpu.memory_space<vmem>>, %arg11: memref<1x32xf32, #tpu.memory_space<vmem>>, %arg12: memref<1x32xf32, #tpu.memory_space<vmem>>, %arg13: memref<1x32xf32, #tpu.memory_space<vmem>>, %arg14: memref<16x32xf32, #tpu.memory_space<vmem>>) attributes {dimension_semantics = [#tpu.dimension_semantics<parallel>], iteration_bounds = array<i64: 1>, scalar_prefetch = 0 : i64, scratch_operands = 0 : i64, tpu.core_type = #tpu.core_type<tc>, window_params = [{transform_indices = @transform_0, window_bounds = array<i64: 16, 32>}, {pipeline_mode = #tpu.pipeline_mode<synchronous>, transform_indices = @transform_1, window_bounds = array<i64: 32, 96>}, {pipeline_mode = #tpu.pipeline_mode<synchronous>, transform_indices = @transform_2, window_bounds = array<i64: 1, 96>}, {pipeline_mode = #tpu.pipeline_mode<synchronous>, transform_indices = @transform_3, window_bounds = array<i64: 32, 32>}, {pipeline_mode = #tpu.pipeline_mode<synchronous>, transform_indices = @transform_4, window_bounds = array<i64: 1, 32>}, {pipeline_mode = #tpu.pipeline_mode<synchronous>, transform_indices = @transform_5, window_bounds = array<i64: 1, 32>}, {pipeline_mode = #tpu.pipeline_mode<synchronous>, transform_indices = @transform_6, window_bounds = array<i64: 1, 32>}, {pipeline_mode = #tpu.pipeline_mode<synchronous>, transform_indices = @transform_7, window_bounds = array<i64: 32, 64>}, {pipeline_mode = #tpu.pipeline_mode<synchronous>, transform_indices = @transform_8, window_bounds = array<i64: 1, 64>}, {pipeline_mode = #tpu.pipeline_mode<synchronous>, transform_indices = @transform_9, window_bounds = array<i64: 64, 32>}, {pipeline_mode = #tpu.pipeline_mode<synchronous>, transform_indices = @transform_10, window_bounds = array<i64: 1, 32>}, {pipeline_mode = #tpu.pipeline_mode<synchronous>, transform_indices = @transform_11, window_bounds = array<i64: 1, 32>}, {pipeline_mode = #tpu.pipeline_mode<synchronous>, transform_indices = @transform_12, window_bounds = array<i64: 1, 32>}, {transform_indices = @transform_13, window_bounds = array<i64: 16, 32>}]} {
    %c0 = arith.constant 0 : index
    %c0_0 = arith.constant 0 : index
    %0 = vector.load %arg1[%c0, %c0_0] : memref<16x32xf32, #tpu.memory_space<vmem>>, vector<16x32xf32>
    %1 = arith.truncf %0 : vector<16x32xf32> to vector<16x32xbf16>
    %c0_1 = arith.constant 0 : index
    %c0_2 = arith.constant 0 : index
    %2 = vector.load %arg2[%c0_1, %c0_2] : memref<32x96xbf16, #tpu.memory_space<vmem>>, vector<32x96xbf16>
    %cst = arith.constant dense<0.000000e+00> : vector<16x96xf32>
    %3 = tpu.matmul %1, %2, %cst {dimension_numbers = #tpu.dot_dimension_numbers<[1], [0], [0], [1], [0, 0, 1, 1], [], []>} : vector<16x32xbf16>, vector<32x96xbf16>, vector<16x96xf32> -> vector<16x96xf32>
    %c0_3 = arith.constant 0 : index
    %c0_4 = arith.constant 0 : index
    %4 = vector.load %arg3[%c0_3, %c0_4] : memref<1x96xf32, #tpu.memory_space<vmem>>, vector<1x96xf32>
    %5 = vector.broadcast %4 : vector<1x96xf32> to vector<16x96xf32>
    %6 = arith.addf %3, %5 : vector<16x96xf32>
    %7 = vector.extract_strided_slice %6 {offsets = [0, 0], sizes = [16, 32], strides = [1, 1]} : vector<16x96xf32> to vector<16x32xf32>
    %8 = vector.shape_cast %7 : vector<16x32xf32> to vector<2x8x32xf32>
    %9 = vector.extract_strided_slice %6 {offsets = [0, 32], sizes = [16, 32], strides = [1, 1]} : vector<16x96xf32> to vector<16x32xf32>
    %10 = vector.shape_cast %9 : vector<16x32xf32> to vector<2x8x32xf32>
    %11 = vector.extract_strided_slice %6 {offsets = [0, 64], sizes = [16, 32], strides = [1, 1]} : vector<16x96xf32> to vector<16x32xf32>
    %12 = vector.shape_cast %11 : vector<16x32xf32> to vector<2x8x32xf32>
    %13 = vector.extract_strided_slice %8 {offsets = [0, 0, 0], sizes = [2, 8, 8], strides = [1, 1, 1]} : vector<2x8x32xf32> to vector<2x8x8xf32>
    %14 = arith.truncf %13 : vector<2x8x8xf32> to vector<2x8x8xbf16>
    %15 = vector.extract_strided_slice %10 {offsets = [0, 0, 0], sizes = [2, 8, 8], strides = [1, 1, 1]} : vector<2x8x32xf32> to vector<2x8x8xf32>
    %16 = arith.truncf %15 : vector<2x8x8xf32> to vector<2x8x8xbf16>
    %17 = vector.extract_strided_slice %12 {offsets = [0, 0, 0], sizes = [2, 8, 8], strides = [1, 1, 1]} : vector<2x8x32xf32> to vector<2x8x8xf32>
    %18 = arith.truncf %17 : vector<2x8x8xf32> to vector<2x8x8xbf16>
    "tpu.trace_start"() <{level = 10 : i32, message = "bqd,bkd->bqk"}> : () -> ()
    %cst_5 = arith.constant dense<0.000000e+00> : vector<2x8x8xf32>
    %19 = tpu.matmul %14, %16, %cst_5 {dimension_numbers = #tpu.dot_dimension_numbers<[2], [2], [1], [1], [0, 0, 0, 1, 1, 1], [0], [0]>} : vector<2x8x8xbf16>, vector<2x8x8xbf16>, vector<2x8x8xf32> -> vector<2x8x8xf32>
    "tpu.trace_stop"() : () -> ()
    %cst_6 = arith.constant 0.353553385 : f32
    %20 = vector.broadcast %cst_6 : f32 to vector<2x8x8xf32>
    %21 = arith.mulf %19, %20 : vector<2x8x8xf32>
    %cst_7 = arith.constant dense<0xFF800000> : vector<2x8xf32>
    %22 = vector.multi_reduction <maximumf>, %21, %cst_7 [2] : vector<2x8x8xf32> to vector<2x8xf32>
    %23 = vector.shape_cast %22 : vector<2x8xf32> to vector<2x8x1xf32>
    %24 = vector.broadcast %23 : vector<2x8x1xf32> to vector<2x8x8xf32>
    %25 = arith.subf %21, %24 : vector<2x8x8xf32>
    %26 = math.exp %25 : vector<2x8x8xf32>
    %cst_8 = arith.constant dense<0.000000e+00> : vector<2x8xf32>
    %27 = vector.multi_reduction <add>, %26, %cst_8 [2] : vector<2x8x8xf32> to vector<2x8xf32>
    %28 = vector.shape_cast %27 : vector<2x8xf32> to vector<2x8x1xf32>
    %29 = tpu.reciprocal %28 {approx = true} : vector<2x8x1xf32> -> vector<2x8x1xf32>
    %30 = vector.broadcast %29 : vector<2x8x1xf32> to vector<2x8x8xf32>
    %31 = arith.mulf %26, %30 : vector<2x8x8xf32>
    %32 = arith.truncf %31 : vector<2x8x8xf32> to vector<2x8x8xbf16>
    "tpu.trace_start"() <{level = 10 : i32, message = "bqk,bkd->bqd"}> : () -> ()
    %cst_9 = arith.constant dense<0.000000e+00> : vector<2x8x8xf32>
    %33 = tpu.matmul %32, %18, %cst_9 {dimension_numbers = #tpu.dot_dimension_numbers<[2], [1], [1], [2], [0, 0, 0, 1, 1, 2], [0], [0]>} : vector<2x8x8xbf16>, vector<2x8x8xbf16>, vector<2x8x8xf32> -> vector<2x8x8xf32>
    "tpu.trace_stop"() : () -> ()
    %34 = vector.extract_strided_slice %8 {offsets = [0, 0, 8], sizes = [2, 8, 8], strides = [1, 1, 1]} : vector<2x8x32xf32> to vector<2x8x8xf32>
    %35 = arith.truncf %34 : vector<2x8x8xf32> to vector<2x8x8xbf16>
    %36 = vector.extract_strided_slice %10 {offsets = [0, 0, 8], sizes = [2, 8, 8], strides = [1, 1, 1]} : vector<2x8x32xf32> to vector<2x8x8xf32>
    %37 = arith.truncf %36 : vector<2x8x8xf32> to vector<2x8x8xbf16>
    %38 = vector.extract_strided_slice %12 {offsets = [0, 0, 8], sizes = [2, 8, 8], strides = [1, 1, 1]} : vector<2x8x32xf32> to vector<2x8x8xf32>
    %39 = arith.truncf %38 : vector<2x8x8xf32> to vector<2x8x8xbf16>
    "tpu.trace_start"() <{level = 10 : i32, message = "bqd,bkd->bqk"}> : () -> ()
    %cst_10 = arith.constant dense<0.000000e+00> : vector<2x8x8xf32>
    %40 = tpu.matmul %35, %37, %cst_10 {dimension_numbers = #tpu.dot_dimension_numbers<[2], [2], [1], [1], [0, 0, 0, 1, 1, 1], [0], [0]>} : vector<2x8x8xbf16>, vector<2x8x8xbf16>, vector<2x8x8xf32> -> vector<2x8x8xf32>
    "tpu.trace_stop"() : () -> ()
    %cst_11 = arith.constant 0.353553385 : f32
    %41 = vector.broadcast %cst_11 : f32 to vector<2x8x8xf32>
    %42 = arith.mulf %40, %41 : vector<2x8x8xf32>
    %cst_12 = arith.constant dense<0xFF800000> : vector<2x8xf32>
    %43 = vector.multi_reduction <maximumf>, %42, %cst_12 [2] : vector<2x8x8xf32> to vector<2x8xf32>
    %44 = vector.shape_cast %43 : vector<2x8xf32> to vector<2x8x1xf32>
    %45 = vector.broadcast %44 : vector<2x8x1xf32> to vector<2x8x8xf32>
    %46 = arith.subf %42, %45 : vector<2x8x8xf32>
    %47 = math.exp %46 : vector<2x8x8xf32>
    %cst_13 = arith.constant dense<0.000000e+00> : vector<2x8xf32>
    %48 = vector.multi_reduction <add>, %47, %cst_13 [2] : vector<2x8x8xf32> to vector<2x8xf32>
    %49 = vector.shape_cast %48 : vector<2x8xf32> to vector<2x8x1xf32>
    %50 = tpu.reciprocal %49 {approx = true} : vector<2x8x1xf32> -> vector<2x8x1xf32>
    %51 = vector.broadcast %50 : vector<2x8x1xf32> to vector<2x8x8xf32>
    %52 = arith.mulf %47, %51 : vector<2x8x8xf32>
    %53 = arith.truncf %52 : vector<2x8x8xf32> to vector<2x8x8xbf16>
    "tpu.trace_start"() <{level = 10 : i32, message = "bqk,bkd->bqd"}> : () -> ()
    %cst_14 = arith.constant dense<0.000000e+00> : vector<2x8x8xf32>
    %54 = tpu.matmul %53, %39, %cst_14 {dimension_numbers = #tpu.dot_dimension_numbers<[2], [1], [1], [2], [0, 0, 0, 1, 1, 2], [0], [0]>} : vector<2x8x8xbf16>, vector<2x8x8xbf16>, vector<2x8x8xf32> -> vector<2x8x8xf32>
    "tpu.trace_stop"() : () -> ()
    %55 = vector.extract_strided_slice %8 {offsets = [0, 0, 16], sizes = [2, 8, 8], strides = [1, 1, 1]} : vector<2x8x32xf32> to vector<2x8x8xf32>
    %56 = arith.truncf %55 : vector<2x8x8xf32> to vector<2x8x8xbf16>
    %57 = vector.extract_strided_slice %10 {offsets = [0, 0, 16], sizes = [2, 8, 8], strides = [1, 1, 1]} : vector<2x8x32xf32> to vector<2x8x8xf32>
    %58 = arith.truncf %57 : vector<2x8x8xf32> to vector<2x8x8xbf16>
    %59 = vector.extract_strided_slice %12 {offsets = [0, 0, 16], sizes = [2, 8, 8], strides = [1, 1, 1]} : vector<2x8x32xf32> to vector<2x8x8xf32>
    %60 = arith.truncf %59 : vector<2x8x8xf32> to vector<2x8x8xbf16>
    "tpu.trace_start"() <{level = 10 : i32, message = "bqd,bkd->bqk"}> : () -> ()
    %cst_15 = arith.constant dense<0.000000e+00> : vector<2x8x8xf32>
    %61 = tpu.matmul %56, %58, %cst_15 {dimension_numbers = #tpu.dot_dimension_numbers<[2], [2], [1], [1], [0, 0, 0, 1, 1, 1], [0], [0]>} : vector<2x8x8xbf16>, vector<2x8x8xbf16>, vector<2x8x8xf32> -> vector<2x8x8xf32>
    "tpu.trace_stop"() : () -> ()
    %cst_16 = arith.constant 0.353553385 : f32
    %62 = vector.broadcast %cst_16 : f32 to vector<2x8x8xf32>
    %63 = arith.mulf %61, %62 : vector<2x8x8xf32>
    %cst_17 = arith.constant dense<0xFF800000> : vector<2x8xf32>
    %64 = vector.multi_reduction <maximumf>, %63, %cst_17 [2] : vector<2x8x8xf32> to vector<2x8xf32>
    %65 = vector.shape_cast %64 : vector<2x8xf32> to vector<2x8x1xf32>
    %66 = vector.broadcast %65 : vector<2x8x1xf32> to vector<2x8x8xf32>
    %67 = arith.subf %63, %66 : vector<2x8x8xf32>
    %68 = math.exp %67 : vector<2x8x8xf32>
    %cst_18 = arith.constant dense<0.000000e+00> : vector<2x8xf32>
    %69 = vector.multi_reduction <add>, %68, %cst_18 [2] : vector<2x8x8xf32> to vector<2x8xf32>
    %70 = vector.shape_cast %69 : vector<2x8xf32> to vector<2x8x1xf32>
    %71 = tpu.reciprocal %70 {approx = true} : vector<2x8x1xf32> -> vector<2x8x1xf32>
    %72 = vector.broadcast %71 : vector<2x8x1xf32> to vector<2x8x8xf32>
    %73 = arith.mulf %68, %72 : vector<2x8x8xf32>
    %74 = arith.truncf %73 : vector<2x8x8xf32> to vector<2x8x8xbf16>
    "tpu.trace_start"() <{level = 10 : i32, message = "bqk,bkd->bqd"}> : () -> ()
    %cst_19 = arith.constant dense<0.000000e+00> : vector<2x8x8xf32>
    %75 = tpu.matmul %74, %60, %cst_19 {dimension_numbers = #tpu.dot_dimension_numbers<[2], [1], [1], [2], [0, 0, 0, 1, 1, 2], [0], [0]>} : vector<2x8x8xbf16>, vector<2x8x8xbf16>, vector<2x8x8xf32> -> vector<2x8x8xf32>
    "tpu.trace_stop"() : () -> ()
    %76 = vector.extract_strided_slice %8 {offsets = [0, 0, 24], sizes = [2, 8, 8], strides = [1, 1, 1]} : vector<2x8x32xf32> to vector<2x8x8xf32>
    %77 = arith.truncf %76 : vector<2x8x8xf32> to vector<2x8x8xbf16>
    %78 = vector.extract_strided_slice %10 {offsets = [0, 0, 24], sizes = [2, 8, 8], strides = [1, 1, 1]} : vector<2x8x32xf32> to vector<2x8x8xf32>
    %79 = arith.truncf %78 : vector<2x8x8xf32> to vector<2x8x8xbf16>
    %80 = vector.extract_strided_slice %12 {offsets = [0, 0, 24], sizes = [2, 8, 8], strides = [1, 1, 1]} : vector<2x8x32xf32> to vector<2x8x8xf32>
    %81 = arith.truncf %80 : vector<2x8x8xf32> to vector<2x8x8xbf16>
    "tpu.trace_start"() <{level = 10 : i32, message = "bqd,bkd->bqk"}> : () -> ()
    %cst_20 = arith.constant dense<0.000000e+00> : vector<2x8x8xf32>
    %82 = tpu.matmul %77, %79, %cst_20 {dimension_numbers = #tpu.dot_dimension_numbers<[2], [2], [1], [1], [0, 0, 0, 1, 1, 1], [0], [0]>} : vector<2x8x8xbf16>, vector<2x8x8xbf16>, vector<2x8x8xf32> -> vector<2x8x8xf32>
    "tpu.trace_stop"() : () -> ()
    %cst_21 = arith.constant 0.353553385 : f32
    %83 = vector.broadcast %cst_21 : f32 to vector<2x8x8xf32>
    %84 = arith.mulf %82, %83 : vector<2x8x8xf32>
    %cst_22 = arith.constant dense<0xFF800000> : vector<2x8xf32>
    %85 = vector.multi_reduction <maximumf>, %84, %cst_22 [2] : vector<2x8x8xf32> to vector<2x8xf32>
    %86 = vector.shape_cast %85 : vector<2x8xf32> to vector<2x8x1xf32>
    %87 = vector.broadcast %86 : vector<2x8x1xf32> to vector<2x8x8xf32>
    %88 = arith.subf %84, %87 : vector<2x8x8xf32>
    %89 = math.exp %88 : vector<2x8x8xf32>
    %cst_23 = arith.constant dense<0.000000e+00> : vector<2x8xf32>
    %90 = vector.multi_reduction <add>, %89, %cst_23 [2] : vector<2x8x8xf32> to vector<2x8xf32>
    %91 = vector.shape_cast %90 : vector<2x8xf32> to vector<2x8x1xf32>
    %92 = tpu.reciprocal %91 {approx = true} : vector<2x8x1xf32> -> vector<2x8x1xf32>
    %93 = vector.broadcast %92 : vector<2x8x1xf32> to vector<2x8x8xf32>
    %94 = arith.mulf %89, %93 : vector<2x8x8xf32>
    %95 = arith.truncf %94 : vector<2x8x8xf32> to vector<2x8x8xbf16>
    "tpu.trace_start"() <{level = 10 : i32, message = "bqk,bkd->bqd"}> : () -> ()
    %cst_24 = arith.constant dense<0.000000e+00> : vector<2x8x8xf32>
    %96 = tpu.matmul %95, %81, %cst_24 {dimension_numbers = #tpu.dot_dimension_numbers<[2], [1], [1], [2], [0, 0, 0, 1, 1, 2], [0], [0]>} : vector<2x8x8xbf16>, vector<2x8x8xbf16>, vector<2x8x8xf32> -> vector<2x8x8xf32>
    "tpu.trace_stop"() : () -> ()
    %97 = tpu.concatenate %33, %54, %75, %96 in 2 : vector<2x8x8xf32>, vector<2x8x8xf32>, vector<2x8x8xf32>, vector<2x8x8xf32> -> vector<2x8x32xf32>
    %98 = vector.shape_cast %97 : vector<2x8x32xf32> to vector<16x32xf32>
    %99 = arith.truncf %98 : vector<16x32xf32> to vector<16x32xbf16>
    %c0_25 = arith.constant 0 : index
    %c0_26 = arith.constant 0 : index
    %100 = vector.load %arg4[%c0_25, %c0_26] : memref<32x32xbf16, #tpu.memory_space<vmem>>, vector<32x32xbf16>
    %cst_27 = arith.constant dense<0.000000e+00> : vector<16x32xf32>
    %101 = tpu.matmul %99, %100, %cst_27 {dimension_numbers = #tpu.dot_dimension_numbers<[1], [0], [0], [1], [0, 0, 1, 1], [], []>} : vector<16x32xbf16>, vector<32x32xbf16>, vector<16x32xf32> -> vector<16x32xf32>
    %c0_28 = arith.constant 0 : index
    %c0_29 = arith.constant 0 : index
    %102 = vector.load %arg5[%c0_28, %c0_29] : memref<1x32xf32, #tpu.memory_space<vmem>>, vector<1x32xf32>
    %103 = vector.broadcast %102 : vector<1x32xf32> to vector<16x32xf32>
    %104 = arith.addf %101, %103 : vector<16x32xf32>
    %105 = arith.addf %0, %104 : vector<16x32xf32>
    %cst_30 = arith.constant dense<0.000000e+00> : vector<16xf32>
    %106 = vector.multi_reduction <add>, %105, %cst_30 [1] : vector<16x32xf32> to vector<16xf32>
    %107 = vector.shape_cast %106 : vector<16xf32> to vector<16x1xf32>
    %cst_31 = arith.constant 3.200000e+01 : f32
    %108 = vector.broadcast %cst_31 : f32 to vector<16x1xf32>
    %109 = arith.divf %107, %108 : vector<16x1xf32>
    %110 = vector.broadcast %109 : vector<16x1xf32> to vector<16x32xf32>
    %111 = arith.subf %105, %110 : vector<16x32xf32>
    %112 = arith.mulf %111, %111 : vector<16x32xf32>
    %cst_32 = arith.constant dense<0.000000e+00> : vector<16xf32>
    %113 = vector.multi_reduction <add>, %112, %cst_32 [1] : vector<16x32xf32> to vector<16xf32>
    %114 = vector.shape_cast %113 : vector<16xf32> to vector<16x1xf32>
    %cst_33 = arith.constant 3.200000e+01 : f32
    %115 = vector.broadcast %cst_33 : f32 to vector<16x1xf32>
    %116 = arith.divf %114, %115 : vector<16x1xf32>
    %117 = vector.broadcast %109 : vector<16x1xf32> to vector<16x32xf32>
    %118 = arith.subf %105, %117 : vector<16x32xf32>
    %cst_34 = arith.constant 9.99999974E-6 : f32
    %119 = vector.broadcast %cst_34 : f32 to vector<16x1xf32>
    %120 = arith.addf %116, %119 : vector<16x1xf32>
    %121 = math.rsqrt %120 : vector<16x1xf32>
    %122 = vector.broadcast %121 : vector<16x1xf32> to vector<16x32xf32>
    %123 = arith.mulf %118, %122 : vector<16x32xf32>
    %c0_35 = arith.constant 0 : index
    %c0_36 = arith.constant 0 : index
    %124 = vector.load %arg6[%c0_35, %c0_36] : memref<1x32xf32, #tpu.memory_space<vmem>>, vector<1x32xf32>
    %125 = vector.broadcast %124 : vector<1x32xf32> to vector<16x32xf32>
    %126 = arith.mulf %123, %125 : vector<16x32xf32>
    %c0_37 = arith.constant 0 : index
    %c0_38 = arith.constant 0 : index
    %127 = vector.load %arg7[%c0_37, %c0_38] : memref<1x32xf32, #tpu.memory_space<vmem>>, vector<1x32xf32>
    %128 = vector.broadcast %127 : vector<1x32xf32> to vector<16x32xf32>
    %129 = arith.addf %126, %128 : vector<16x32xf32>
    %130 = arith.truncf %129 : vector<16x32xf32> to vector<16x32xbf16>
    %c0_39 = arith.constant 0 : index
    %c0_40 = arith.constant 0 : index
    %131 = vector.load %arg8[%c0_39, %c0_40] : memref<32x64xbf16, #tpu.memory_space<vmem>>, vector<32x64xbf16>
    %cst_41 = arith.constant dense<0.000000e+00> : vector<16x64xf32>
    %132 = tpu.matmul %130, %131, %cst_41 {dimension_numbers = #tpu.dot_dimension_numbers<[1], [0], [0], [1], [0, 0, 1, 1], [], []>} : vector<16x32xbf16>, vector<32x64xbf16>, vector<16x64xf32> -> vector<16x64xf32>
    %c0_42 = arith.constant 0 : index
    %c0_43 = arith.constant 0 : index
    %133 = vector.load %arg9[%c0_42, %c0_43] : memref<1x64xf32, #tpu.memory_space<vmem>>, vector<1x64xf32>
    %134 = vector.broadcast %133 : vector<1x64xf32> to vector<16x64xf32>
    %135 = arith.addf %132, %134 : vector<16x64xf32>
    %cst_44 = arith.constant 0.000000e+00 : f32
    %136 = vector.broadcast %cst_44 : f32 to vector<16x64xf32>
    %137 = arith.maximumf %135, %136 : vector<16x64xf32>
    %138 = arith.truncf %137 : vector<16x64xf32> to vector<16x64xbf16>
    %c0_45 = arith.constant 0 : index
    %c0_46 = arith.constant 0 : index
    %139 = vector.load %arg10[%c0_45, %c0_46] : memref<64x32xbf16, #tpu.memory_space<vmem>>, vector<64x32xbf16>
    %cst_47 = arith.constant dense<0.000000e+00> : vector<16x32xf32>
    %140 = tpu.matmul %138, %139, %cst_47 {dimension_numbers = #tpu.dot_dimension_numbers<[1], [0], [0], [1], [0, 0, 1, 1], [], []>} : vector<16x64xbf16>, vector<64x32xbf16>, vector<16x32xf32> -> vector<16x32xf32>
    %c0_48 = arith.constant 0 : index
    %c0_49 = arith.constant 0 : index
    %141 = vector.load %arg11[%c0_48, %c0_49] : memref<1x32xf32, #tpu.memory_space<vmem>>, vector<1x32xf32>
    %142 = vector.broadcast %141 : vector<1x32xf32> to vector<16x32xf32>
    %143 = arith.addf %140, %142 : vector<16x32xf32>
    %144 = arith.addf %129, %143 : vector<16x32xf32>
    %cst_50 = arith.constant dense<0.000000e+00> : vector<16xf32>
    %145 = vector.multi_reduction <add>, %144, %cst_50 [1] : vector<16x32xf32> to vector<16xf32>
    %146 = vector.shape_cast %145 : vector<16xf32> to vector<16x1xf32>
    %cst_51 = arith.constant 3.200000e+01 : f32
    %147 = vector.broadcast %cst_51 : f32 to vector<16x1xf32>
    %148 = arith.divf %146, %147 : vector<16x1xf32>
    %149 = vector.broadcast %148 : vector<16x1xf32> to vector<16x32xf32>
    %150 = arith.subf %144, %149 : vector<16x32xf32>
    %151 = arith.mulf %150, %150 : vector<16x32xf32>
    %cst_52 = arith.constant dense<0.000000e+00> : vector<16xf32>
    %152 = vector.multi_reduction <add>, %151, %cst_52 [1] : vector<16x32xf32> to vector<16xf32>
    %153 = vector.shape_cast %152 : vector<16xf32> to vector<16x1xf32>
    %cst_53 = arith.constant 3.200000e+01 : f32
    %154 = vector.broadcast %cst_53 : f32 to vector<16x1xf32>
    %155 = arith.divf %153, %154 : vector<16x1xf32>
    %156 = vector.broadcast %148 : vector<16x1xf32> to vector<16x32xf32>
    %157 = arith.subf %144, %156 : vector<16x32xf32>
    %cst_54 = arith.constant 9.99999974E-6 : f32
    %158 = vector.broadcast %cst_54 : f32 to vector<16x1xf32>
    %159 = arith.addf %155, %158 : vector<16x1xf32>
    %160 = math.rsqrt %159 : vector<16x1xf32>
    %161 = vector.broadcast %160 : vector<16x1xf32> to vector<16x32xf32>
    %162 = arith.mulf %157, %161 : vector<16x32xf32>
    %c0_55 = arith.constant 0 : index
    %c0_56 = arith.constant 0 : index
    %163 = vector.load %arg12[%c0_55, %c0_56] : memref<1x32xf32, #tpu.memory_space<vmem>>, vector<1x32xf32>
    %164 = vector.broadcast %163 : vector<1x32xf32> to vector<16x32xf32>
    %165 = arith.mulf %162, %164 : vector<16x32xf32>
    %c0_57 = arith.constant 0 : index
    %c0_58 = arith.constant 0 : index
    %166 = vector.load %arg13[%c0_57, %c0_58] : memref<1x32xf32, #tpu.memory_space<vmem>>, vector<1x32xf32>
    %167 = vector.broadcast %166 : vector<1x32xf32> to vector<16x32xf32>
    %168 = arith.addf %165, %167 : vector<16x32xf32>
    %c0_59 = arith.constant 0 : index
    %c0_60 = arith.constant 0 : index
    %169 = vector.load %arg14[%c0_59, %c0_60] : memref<16x32xf32, #tpu.memory_space<vmem>>, vector<16x32xf32>
    tpu.vector_store %arg14[%c0_59, %c0_60], %168 {strides = array<i32>} : memref<16x32xf32, #tpu.memory_space<vmem>>, vector<16x32xf32>,
    return
  }
  func.func @transform_0(%arg0: i32) -> (i32, i32) {
    %c0_i32 = arith.constant 0 : i32
    %c0_i32_0 = arith.constant 0 : i32
    return %arg0, %c0_i32 : i32, i32
  }
  func.func @transform_1(%arg0: i32) -> (i32, i32) {
    %c0_i32 = arith.constant 0 : i32
    %c0_i32_0 = arith.constant 0 : i32
    %c0_i32_1 = arith.constant 0 : i32
    return %c0_i32, %c0_i32_0 : i32, i32
  }
  func.func @transform_2(%arg0: i32) -> (i32, i32) {
    %c0_i32 = arith.constant 0 : i32
    %c0_i32_0 = arith.constant 0 : i32
    %c0_i32_1 = arith.constant 0 : i32
    return %c0_i32, %c0_i32_0 : i32, i32
  }
  func.func @transform_3(%arg0: i32) -> (i32, i32) {
    %c0_i32 = arith.constant 0 : i32
    %c0_i32_0 = arith.constant 0 : i32
    %c0_i32_1 = arith.constant 0 : i32
    return %c0_i32, %c0_i32_0 : i32, i32
  }
  func.func @transform_4(%arg0: i32) -> (i32, i32) {
    %c0_i32 = arith.constant 0 : i32
    %c0_i32_0 = arith.constant 0 : i32
    %c0_i32_1 = arith.constant 0 : i32
    return %c0_i32, %c0_i32_0 : i32, i32
  }
  func.func @transform_5(%arg0: i32) -> (i32, i32) {
    %c0_i32 = arith.constant 0 : i32
    %c0_i32_0 = arith.constant 0 : i32
    %c0_i32_1 = arith.constant 0 : i32
    return %c0_i32, %c0_i32_0 : i32, i32
  }
  func.func @transform_6(%arg0: i32) -> (i32, i32) {
    %c0_i32 = arith.constant 0 : i32
    %c0_i32_0 = arith.constant 0 : i32
    %c0_i32_1 = arith.constant 0 : i32
    return %c0_i32, %c0_i32_0 : i32, i32
  }
  func.func @transform_7(%arg0: i32) -> (i32, i32) {
    %c0_i32 = arith.constant 0 : i32
    %c0_i32_0 = arith.constant 0 : i32
    %c0_i32_1 = arith.constant 0 : i32
    return %c0_i32, %c0_i32_0 : i32, i32
  }
  func.func @transform_8(%arg0: i32) -> (i32, i32) {
    %c0_i32 = arith.constant 0 : i32
    %c0_i32_0 = arith.constant 0 : i32
    %c0_i32_1 = arith.constant 0 : i32
    return %c0_i32, %c0_i32_0 : i32, i32
  }
  func.func @transform_9(%arg0: i32) -> (i32, i32) {
    %c0_i32 = arith.constant 0 : i32
    %c0_i32_0 = arith.constant 0 : i32
    %c0_i32_1 = arith.constant 0 : i32
    return %c0_i32, %c0_i32_0 : i32, i32
  }
  func.func @transform_10(%arg0: i32) -> (i32, i32) {
    %c0_i32 = arith.constant 0 : i32
    %c0_i32_0 = arith.constant 0 : i32
    %c0_i32_1 = arith.constant 0 : i32
    return %c0_i32, %c0_i32_0 : i32, i32
  }
  func.func @transform_11(%arg0: i32) -> (i32, i32) {
    %c0_i32 = arith.constant 0 : i32
    %c0_i32_0 = arith.constant 0 : i32
    %c0_i32_1 = arith.constant 0 : i32
    return %c0_i32, %c0_i32_0 : i32, i32
  }
  func.func @transform_12(%arg0: i32) -> (i32, i32) {
    %c0_i32 = arith.constant 0 : i32
    %c0_i32_0 = arith.constant 0 : i32
    %c0_i32_1 = arith.constant 0 : i32
    return %c0_i32, %c0_i32_0 : i32, i32
  }
  func.func @transform_13(%arg0: i32) -> (i32, i32) {
    %c0_i32 = arith.constant 0 : i32
    %c0_i32_0 = arith.constant 0 : i32
    return %arg0, %c0_i32 : i32, i32
  }
}

</mosaic_0001>

<llo_original>
// kernel: tpu_custom_call.1
$region0: #{tpu_custom_call.1}
  #allocation0 [shape = 'u32[]', space=smem, size = 0x4, offset = 0x4, fixed_abs, tag = 'smem constant byte address 0x4 - core index']
  #allocation1 [shape = 'u32[144,128]{1,0:T(1,128)}', space=vmem, size = 0x12000, scoped, tag = 'internal scratch']
  %s0 = inlined_call_operand.vmem [shape: f32[16,32], index: 0, kind: input, shape index: {}]
  %s1 = inlined_call_operand.vmem [shape: bf16[32,96], index: 1, kind: input, shape index: {}]
  %s2 = inlined_call_operand.hbm [shape: f32[1,96], index: 2, kind: input, shape index: {}]
  %s3 = inlined_call_operand.vmem [shape: bf16[32,32], index: 3, kind: input, shape index: {}]
  %s4 = inlined_call_operand.hbm [shape: f32[1,32], index: 4, kind: input, shape index: {}]
  %s5 = inlined_call_operand.hbm [shape: f32[1,32], index: 5, kind: input, shape index: {}]
  %s6 = inlined_call_operand.hbm [shape: f32[1,32], index: 6, kind: input, shape index: {}]
  %s7 = inlined_call_operand.hbm [shape: bf16[32,64], index: 7, kind: input, shape index: {}]
  %s8 = inlined_call_operand.hbm [shape: f32[1,64], index: 8, kind: input, shape index: {}]
  %s9 = inlined_call_operand.vmem [shape: bf16[64,32], index: 9, kind: input, shape index: {}]
  %s10 = inlined_call_operand.vmem [shape: f32[1,32], index: 10, kind: input, shape index: {}]
  %s11 = inlined_call_operand.vmem [shape: f32[1,32], index: 11, kind: input, shape index: {}]
  %s12 = inlined_call_operand.vmem [shape: f32[1,32], index: 12, kind: input, shape index: {}]
  %s13 = inlined_call_operand.hbm [shape: f32[16,32], index: 13, kind: output, shape index: {}]
  %s14 = sld [smem:[#allocation0]]
  $region86: #{tpu_custom_call.1} parent=0
    _
  %s16 = ssub.s32 1, %s14
  %s17 = scalar_select 0, %s16, %s14
  $region1: #{tpu_custom_call.1} parent=0
    #allocation2 [shape = 'u8[512]{0}', space=vmem, size = 0x400, scoped, tag = 'input window, operand 2, single buffered']
    #allocation3 [shape = 's32[1]{0}', space=sflag, size = 0x4, scoped, tag = 'scoped memory for tpu_custom_call.1']
    #allocation4 [shape = 's32[1]{0}', space=sflag, size = 0x4, scoped, tag = 'scoped memory for tpu_custom_call.1']
    #allocation5 [shape = 'u8[512]{0}', space=vmem, size = 0x400, scoped, tag = 'input window, operand 4, single buffered']
    #allocation6 [shape = 's32[1]{0}', space=sflag, size = 0x4, scoped, tag = 'scoped memory for tpu_custom_call.1']
    #allocation7 [shape = 'u8[512]{0}', space=vmem, size = 0x400, scoped, tag = 'input window, operand 5, single buffered']
    #allocation8 [shape = 'u8[512]{0}', space=vmem, size = 0x400, scoped, tag = 'input window, operand 6, single buffered']
    #allocation9 [shape = 's32[1]{0}', space=sflag, size = 0x4, scoped, tag = 'scoped memory for tpu_custom_call.1']
    #allocation10 [shape = 'u8[8192]{0}', space=vmem, size = 0x2000, scoped, tag = 'input window, operand 7, single buffered']
    #allocation11 [shape = 'u8[512]{0}', space=vmem, size = 0x400, scoped, tag = 'input window, operand 8, single buffered']
    #allocation12 [shape = 's32[1]{0}', space=sflag, size = 0x4, scoped, tag = 'scoped memory for tpu_custom_call.1']
    #allocation13 [shape = 'u8[8192]{0}', space=vmem, size = 0x2000, scoped, tag = 'output window, operand 0, single buffered']
    %18 = vsyncpa [#allocation3], 0
    %19 = vsyncpa [#allocation6], 0
    %20 = vsyncpa [#allocation9], 0
    %21 = vsyncpa [#allocation12], 0
    %22 = vsyncpa [#allocation4], 0
    // Predicated region
    $region2: #{tpu_custom_call.1} parent=1 // pred_check
      _
    $region3: #{tpu_custom_call.1} parent=1 // pred_check_branch
      %24 = sbr.rel (0) target = $region5
    $region4: #{tpu_custom_call.1} parent=1 // pred_region
      _
    $region5: #{tpu_custom_call.1} parent=1 // pred_fallthru
      _
    // Predicated region
    $region6: #{tpu_custom_call.1} parent=1 // pred_check
      _
    $region7: #{tpu_custom_call.1} parent=1 // pred_check_branch
      %26 = sbr.rel (0) target = $region9
    $region8: #{tpu_custom_call.1} parent=1 // pred_region
      _
    $region9: #{tpu_custom_call.1} parent=1 // pred_fallthru
      _
    // Predicated region
    $region10: #{tpu_custom_call.1} parent=1 // pred_check
      _
    $region11: #{tpu_custom_call.1} parent=1 // pred_check_branch
      %28 = sbr.rel (0) target = $region13
    $region12: #{tpu_custom_call.1} parent=1 // pred_region
      %s30 = ssub.s32 16, 16
      %31 = vsyncadd [#allocation3], %s30
      %s33 = sshll.u32 [#allocation2], 4
      %s34 = int_to_ptr.vmem [resolvable:$true] %s33
      %36 = dma.hbm_to_vmem [thread:$0]  %s2, 16, %s34, [#allocation3]
    $region13: #{tpu_custom_call.1} parent=1 // pred_fallthru
      _
    // Predicated region
    $region14: #{tpu_custom_call.1} parent=1 // pred_check
      _
    $region15: #{tpu_custom_call.1} parent=1 // pred_check_branch
      %38 = sbr.rel (0) target = $region17
    $region16: #{tpu_custom_call.1} parent=1 // pred_region
      _
    $region17: #{tpu_custom_call.1} parent=1 // pred_fallthru
      _
    // Predicated region
    $region18: #{tpu_custom_call.1} parent=1 // pred_check
      _
    $region19: #{tpu_custom_call.1} parent=1 // pred_check_branch
      %40 = sbr.rel (0) target = $region21
    $region20: #{tpu_custom_call.1} parent=1 // pred_region
      %s42 = ssub.s32 16, 16
      %43 = vsyncadd [#allocation6], %s42
      %s45 = sshll.u32 [#allocation5], 4
      %s46 = int_to_ptr.vmem [resolvable:$true] %s45
      %48 = dma.hbm_to_vmem [thread:$0]  %s4, 16, %s46, [#allocation6]
    $region21: #{tpu_custom_call.1} parent=1 // pred_fallthru
      _
    // Predicated region
    $region22: #{tpu_custom_call.1} parent=1 // pred_check
      _
    $region23: #{tpu_custom_call.1} parent=1 // pred_check_branch
      %50 = sbr.rel (0) target = $region25
    $region24: #{tpu_custom_call.1} parent=1 // pred_region
      %s52 = ssub.s32 16, 16
      %53 = vsyncadd [#allocation6], %s52
      %s55 = sshll.u32 [#allocation7], 4
      %s56 = int_to_ptr.vmem [resolvable:$true] %s55
      %58 = dma.hbm_to_vmem [thread:$0]  %s5, 16, %s56, [#allocation6]
    $region25: #{tpu_custom_call.1} parent=1 // pred_fallthru
      _
    // Predicated region
    $region26: #{tpu_custom_call.1} parent=1 // pred_check
      _
    $region27: #{tpu_custom_call.1} parent=1 // pred_check_branch
      %60 = sbr.rel (0) target = $region29
    $region28: #{tpu_custom_call.1} parent=1 // pred_region
      %s62 = ssub.s32 16, 16
      %63 = vsyncadd [#allocation9], %s62
      %s65 = sshll.u32 [#allocation8], 4
      %s66 = int_to_ptr.vmem [resolvable:$true] %s65
      %68 = dma.hbm_to_vmem [thread:$0]  %s6, 16, %s66, [#allocation9]
    $region29: #{tpu_custom_call.1} parent=1 // pred_fallthru
      _
    // Predicated region
    $region30: #{tpu_custom_call.1} parent=1 // pred_check
      _
    $region31: #{tpu_custom_call.1} parent=1 // pred_check_branch
      %70 = sbr.rel (0) target = $region33
    $region32: #{tpu_custom_call.1} parent=1 // pred_region
      %s72 = ssub.s32 256, 256
      %73 = vsyncadd [#allocation9], %s72
      %s74 = sshll.u32 [#allocation10], 4
      %s75 = int_to_ptr.vmem [resolvable:$true] %s74
      %80 = dma.hbm_to_vmem [thread:$0]  %s7, 256, %s75, [#allocation9], 64, 64, 4
    $region33: #{tpu_custom_call.1} parent=1 // pred_fallthru
      _
    // Predicated region
    $region34: #{tpu_custom_call.1} parent=1 // pred_check
      _
    $region35: #{tpu_custom_call.1} parent=1 // pred_check_branch
      %82 = sbr.rel (0) target = $region37
    $region36: #{tpu_custom_call.1} parent=1 // pred_region
      %s84 = ssub.s32 16, 16
      %85 = vsyncadd [#allocation12], %s84
      %s87 = sshll.u32 [#allocation11], 4
      %s88 = int_to_ptr.vmem [resolvable:$true] %s87
      %90 = dma.hbm_to_vmem [thread:$0]  %s8, 16, %s88, [#allocation12]
    $region37: #{tpu_custom_call.1} parent=1 // pred_fallthru
      _
    // Predicated region
    $region38: #{tpu_custom_call.1} parent=1 // pred_check
      _
    $region39: #{tpu_custom_call.1} parent=1 // pred_check_branch
      %92 = sbr.rel (0) target = $region41
    $region40: #{tpu_custom_call.1} parent=1 // pred_region
      _
    $region41: #{tpu_custom_call.1} parent=1 // pred_fallthru
      _
    // Predicated region
    $region42: #{tpu_custom_call.1} parent=1 // pred_check
      _
    $region43: #{tpu_custom_call.1} parent=1 // pred_check_branch
      %94 = sbr.rel (0) target = $region45
    $region44: #{tpu_custom_call.1} parent=1 // pred_region
      _
    $region45: #{tpu_custom_call.1} parent=1 // pred_fallthru
      _
    // Predicated region
    $region46: #{tpu_custom_call.1} parent=1 // pred_check
      _
    $region47: #{tpu_custom_call.1} parent=1 // pred_check_branch
      %96 = sbr.rel (0) target = $region49
    $region48: #{tpu_custom_call.1} parent=1 // pred_region
      _
    $region49: #{tpu_custom_call.1} parent=1 // pred_fallthru
      _
    // Predicated region
    $region50: #{tpu_custom_call.1} parent=1 // pred_check
      _
    $region51: #{tpu_custom_call.1} parent=1 // pred_check_branch
      %98 = sbr.rel (0) target = $region53
    $region52: #{tpu_custom_call.1} parent=1 // pred_region
      _
    $region53: #{tpu_custom_call.1} parent=1 // pred_fallthru
      _
    // Predicated region
    $region54: #{tpu_custom_call.1} parent=1 // pred_check
      _
    $region55: #{tpu_custom_call.1} parent=1 // pred_check_branch
      %100 = sbr.rel (0) target = $region57
    $region56: #{tpu_custom_call.1} parent=1 // pred_region
      %101 = dma.done [#allocation3], 16
    $region57: #{tpu_custom_call.1} parent=1 // pred_fallthru
      _
    // Predicated region
    $region58: #{tpu_custom_call.1} parent=1 // pred_check
      _
    $region59: #{tpu_custom_call.1} parent=1 // pred_check_branch
      %103 = sbr.rel (0) target = $region61
    $region60: #{tpu_custom_call.1} parent=1 // pred_region
      %104 = dma.done [#allocation6], 16
    $region61: #{tpu_custom_call.1} parent=1 // pred_fallthru
      _
    // Predicated region
    $region62: #{tpu_custom_call.1} parent=1 // pred_check
      _
    $region63: #{tpu_custom_call.1} parent=1 // pred_check_branch
      %106 = sbr.rel (0) target = $region65
    $region64: #{tpu_custom_call.1} parent=1 // pred_region
      %107 = dma.done [#allocation6], 16
    $region65: #{tpu_custom_call.1} parent=1 // pred_fallthru
      _
    // Predicated region
    $region66: #{tpu_custom_call.1} parent=1 // pred_check
      _
    $region67: #{tpu_custom_call.1} parent=1 // pred_check_branch
      %109 = sbr.rel (0) target = $region69
    $region68: #{tpu_custom_call.1} parent=1 // pred_region
      %110 = dma.done [#allocation9], 16
    $region69: #{tpu_custom_call.1} parent=1 // pred_fallthru
      _
    // Predicated region
    $region70: #{tpu_custom_call.1} parent=1 // pred_check
      _
    $region71: #{tpu_custom_call.1} parent=1 // pred_check_branch
      %112 = sbr.rel (0) target = $region73
    $region72: #{tpu_custom_call.1} parent=1 // pred_region
      %113 = dma.done [#allocation9], 256
    $region73: #{tpu_custom_call.1} parent=1 // pred_fallthru
      _
    // Predicated region
    $region74: #{tpu_custom_call.1} parent=1 // pred_check
      _
    $region75: #{tpu_custom_call.1} parent=1 // pred_check_branch
      %115 = sbr.rel (0) target = $region77
    $region76: #{tpu_custom_call.1} parent=1 // pred_region
      %116 = dma.done [#allocation12], 16
    $region77: #{tpu_custom_call.1} parent=1 // pred_fallthru
      _
    %v118 = vld [vmem:[%s0] sm:$0xff]
    %v119 = vld [vmem:[%s0 + $0x8] sm:$0xff]
    %v120 = vpack.c.bf16 %v119, %v118
    %v121 = vld [vmem:[%s1] sm:$0xf]
    %v122 = vld [vmem:[%s1 + $0x4] sm:$0xf]
    %v123 = vld [vmem:[%s1 + $0x8] sm:$0xf]
    %v124 = vld [vmem:[%s1 + $0xc] sm:$0xf]
    %v125 = vld [vmem:[#allocation2] sm:$0x1]
    %v127 = vlaneseq
    %v128 = vshrl.u32 %v127, 7
    %v129 = vsub.s32 0, %v128
    %v130 = vrot.slane %v125, %v129
    %v136 = vunpack.c.l.b16 %v121
    %v137 = vunpack.c.l.b16 %v122
    %v138 = vunpack.c.l.b16 %v123
    %v139 = vunpack.c.l.b16 %v124
    %v140 = vpack.c.b16 %v137, %v136
    %v141 = vpack.c.b16 %v139, %v138
    %vm144 = vcmask 261120
    %v146 = vsel %vm144, %v120, 0
    %148 = vmatprep.subr.bf16.mxu0 0
    %149 = vmatpush1.bf16.msra.mxu0 0
    %150 = vmatprep.subr.bf16.mxu0 0
    %151 = vmatpush1.bf16.msra.mxu0 0
    %152 = vmatprep.subr.bf16.mxu0 0
    %153 = vmatpush1.bf16.msra.mxu0 0
    %154 = vmatprep.subr.bf16.mxu0 0
    %155 = vmatpush1.bf16.msra.mxu0 0
    %156 = vmatprep.subr.bf16.mxu0 0
    %157 = vmatpush1.bf16.msra.mxu0 0
    %158 = vmatprep.subr.bf16.mxu0 0
    %159 = vmatpush1.bf16.msra.mxu0 0
    %160 = vmatprep.subr.bf16.mxu0 0
    %161 = vmatpush1.bf16.msra.mxu0 %v141
    %162 = vmatprep.subr.bf16.mxu0 0
    %163 = vmatpush1.bf16.msra.mxu0 %v140
    %164 = vmatprep.subr.bf16.mxu0 0
    %165 = vmatpush2.bf16.msra.mxu0 0
    %166 = vmatprep.subr.bf16.mxu0 0
    %167 = vmatpush2.bf16.msra.mxu0 0
    %168 = vmatprep.subr.bf16.mxu0 0
    %169 = vmatpush2.bf16.msra.mxu0 0
    %170 = vmatprep.subr.bf16.mxu0 0
    %171 = vmatpush2.bf16.msra.mxu0 0
    %172 = vmatprep.subr.bf16.mxu0 0
    %173 = vmatpush2.bf16.msra.mxu0 0
    %174 = vmatprep.subr.bf16.mxu0 0
    %175 = vmatpush2.bf16.msra.mxu0 0
    %176 = vmatprep.subr.bf16.mxu0 0
    %177 = vmatpush2.bf16.msra.mxu0 0
    %178 = vmatprep.subr.bf16.mxu0 0
    %179 = vmatpush2.bf16.msra.mxu0 0
    %180 = vmatprep.mubr.bf16.mxu0 0
    %181 = vmatmul.mubr.bf16.gmra.mxu0 %v146
    %v182 = vpop.f32.mrf.mxu0
    %v183 = vadd.f32 %v130, %v182
    %v184 = vpop.f32.mrf.mxu0
    %v185 = vpop.f32.mrf.mxu0
    %v186 = vadd.f32 %v130, %v185
    %v187 = vpop.f32.mrf.mxu0
    %188 = vdwg.mxu0
    %v189 = vpack.c.bf16 %v183, %v183
    %v190 = vpack.c.bf16 %v186, %v186
    %192 = vrot.lane.b32.xlu0 %v189, 96
    %v193 = vpop.permute.xlu0 %192
    %vm194 = vcmask 64512
    %v196 = vsel %vm194, %v189, 0
    %v199 = vsel %vm194, %v193, 0
    %201 = vmatprep.subr.bf16.mxu0 0
    %202 = vmatpush1.bf16.xpose.msra.mxu0 0
    %203 = vmatprep.subr.bf16.mxu0 0
    %204 = vmatpush1.bf16.xpose.msra.mxu0 0
    %205 = vmatprep.subr.bf16.mxu0 0
    %206 = vmatpush1.bf16.xpose.msra.mxu0 0
    %207 = vmatprep.subr.bf16.mxu0 0
    %208 = vmatpush1.bf16.xpose.msra.mxu0 0
    %209 = vmatprep.subr.bf16.mxu0 0
    %210 = vmatpush1.bf16.xpose.msra.mxu0 0
    %211 = vmatprep.subr.bf16.mxu0 0
    %212 = vmatpush1.bf16.xpose.msra.mxu0 0
    %213 = vmatprep.subr.bf16.mxu0 0
    %214 = vmatpush1.bf16.xpose.msra.mxu0 0
    %215 = vmatprep.subr.bf16.mxu0 0
    %216 = vmatpush1.bf16.xpose.msra.mxu0 %v199
    %217 = vmatprep.subr.bf16.mxu0 0
    %218 = vmatpush2.bf16.xpose.msra.mxu0 0
    %219 = vmatprep.subr.bf16.mxu0 0
    %220 = vmatpush2.bf16.xpose.msra.mxu0 0
    %221 = vmatprep.subr.bf16.mxu0 0
    %222 = vmatpush2.bf16.xpose.msra.mxu0 0
    %223 = vmatprep.subr.bf16.mxu0 0
    %224 = vmatpush2.bf16.xpose.msra.mxu0 0
    %225 = vmatprep.subr.bf16.mxu0 0
    %226 = vmatpush2.bf16.xpose.msra.mxu0 0
    %227 = vmatprep.subr.bf16.mxu0 0
    %228 = vmatpush2.bf16.xpose.msra.mxu0 0
    %229 = vmatprep.subr.bf16.mxu0 0
    %230 = vmatpush2.bf16.xpose.msra.mxu0 0
    %231 = vmatprep.subr.bf16.mxu0 0
    %232 = vmatpush2.bf16.xpose.msra.mxu0 0
    %233 = vmatprep.mubr.bf16.mxu0 0
    %234 = vmatmul.mubr.bf16.gmra.mxu0 %v196
    %v235 = vpop.f32.mrf.mxu0
    %v236 = vadd.f32 0.0, %v235
    %v237 = vpop.f32.mrf.mxu0
    %v238 = vpop.f32.mrf.mxu0
    %v239 = vpop.f32.mrf.mxu0
    %240 = vdwg.mxu0
    %242 = vrot.lane.b32.xlu0 %v190, 96
    %v243 = vpop.permute.xlu0 %242
    %v245 = vsel %vm194, %v190, 0
    %v248 = vsel %vm194, %v243, 0
    %250 = vmatprep.subr.bf16.mxu0 0
    %251 = vmatpush1.bf16.xpose.msra.mxu0 0
    %252 = vmatprep.subr.bf16.mxu0 0
    %253 = vmatpush1.bf16.xpose.msra.mxu0 0
    %254 = vmatprep.subr.bf16.mxu0 0
    %255 = vmatpush1.bf16.xpose.msra.mxu0 0
    %256 = vmatprep.subr.bf16.mxu0 0
    %257 = vmatpush1.bf16.xpose.msra.mxu0 0
    %258 = vmatprep.subr.bf16.mxu0 0
    %259 = vmatpush1.bf16.xpose.msra.mxu0 0
    %260 = vmatprep.subr.bf16.mxu0 0
    %261 = vmatpush1.bf16.xpose.msra.mxu0 0
    %262 = vmatprep.subr.bf16.mxu0 0
    %263 = vmatpush1.bf16.xpose.msra.mxu0 0
    %264 = vmatprep.subr.bf16.mxu0 0
    %265 = vmatpush1.bf16.xpose.msra.mxu0 %v248
    %266 = vmatprep.subr.bf16.mxu0 0
    %267 = vmatpush2.bf16.xpose.msra.mxu0 0
    %268 = vmatprep.subr.bf16.mxu0 0
    %269 = vmatpush2.bf16.xpose.msra.mxu0 0
    %270 = vmatprep.subr.bf16.mxu0 0
    %271 = vmatpush2.bf16.xpose.msra.mxu0 0
    %272 = vmatprep.subr.bf16.mxu0 0
    %273 = vmatpush2.bf16.xpose.msra.mxu0 0
    %274 = vmatprep.subr.bf16.mxu0 0
    %275 = vmatpush2.bf16.xpose.msra.mxu0 0
    %276 = vmatprep.subr.bf16.mxu0 0
    %277 = vmatpush2.bf16.xpose.msra.mxu0 0
    %278 = vmatprep.subr.bf16.mxu0 0
    %279 = vmatpush2.bf16.xpose.msra.mxu0 0
    %280 = vmatprep.subr.bf16.mxu0 0
    %281 = vmatpush2.bf16.xpose.msra.mxu0 0
    %282 = vmatprep.mubr.bf16.mxu0 0
    %283 = vmatmul.mubr.bf16.gmra.mxu0 %v245
    %v284 = vpop.f32.mrf.mxu0
    %v285 = vadd.f32 0.0, %v284
    %v286 = vpop.f32.mrf.mxu0
    %v287 = vpop.f32.mrf.mxu0
    %v288 = vpop.f32.mrf.mxu0
    %289 = vdwg.mxu0
    %v290 = vmul.f32 %v236, 0.35355338
    %v291 = vmul.f32 %v285, 0.35355338
    %v292 = vsel %vm194, %v290, -inf
    %293 = vmax.xlane.f32.xlu0 %v292
    %v294 = vpop.xlane.xlu0 %293
    %v295 = vsel %vm194, %v291, -inf
    %296 = vmax.xlane.f32.xlu0 %v295
    %v297 = vpop.xlane.xlu0 %296
    %v298 = vsub.f32 %v290, %v294
    %v299 = vsub.f32 %v291, %v297
    %v300 = vmul.f32 %v298, 1.442695
    %v301 = vpow.pop %v300
    %v302 = vmul.f32 %v299, 1.442695
    %v303 = vpow.pop %v302
    %v304 = vsel %vm194, %v301, 0.0
    %305 = vadd.xlane.f32.xlu0 %v304
    %v306 = vpop.xlane.xlu0 %305
    %v307 = vsel %vm194, %v303, 0.0
    %308 = vadd.xlane.f32.xlu0 %v307
    %v309 = vpop.xlane.xlu0 %308
    %v310 = vrcp.pop %v306
    %v311 = vrcp.pop %v309
    %v312 = vmul.f32 %v301, %v310
    %v313 = vmul.f32 %v303, %v311
    %v314 = vpack.c.bf16 %v312, %v312
    %v315 = vpack.c.bf16 %v313, %v313
    %316 = vrot.lane.b32.xlu0 %v189, 64
    %v317 = vpop.permute.xlu0 %316
    %v319 = vsel %vm194, %v314, 0
    %vm321 = vcmask 1043456
    %v323 = vsel %vm321, %v317, 0
    %325 = vmatprep.subr.bf16.mxu0 0
    %326 = vmatpush1.bf16.msra.mxu0 0
    %327 = vmatprep.subr.bf16.mxu0 0
    %328 = vmatpush1.bf16.msra.mxu0 0
    %329 = vmatprep.subr.bf16.mxu0 0
    %330 = vmatpush1.bf16.msra.mxu0 0
    %331 = vmatprep.subr.bf16.mxu0 0
    %332 = vmatpush1.bf16.msra.mxu0 0
    %333 = vmatprep.subr.bf16.mxu0 0
    %334 = vmatpush1.bf16.msra.mxu0 0
    %335 = vmatprep.subr.bf16.mxu0 0
    %336 = vmatpush1.bf16.msra.mxu0 0
    %337 = vmatprep.subr.bf16.mxu0 0
    %338 = vmatpush1.bf16.msra.mxu0 0
    %339 = vmatprep.subr.bf16.mxu0 0
    %340 = vmatpush1.bf16.msra.mxu0 %v323
    %341 = vmatprep.subr.bf16.mxu0 0
    %342 = vmatpush2.bf16.msra.mxu0 0
    %343 = vmatprep.subr.bf16.mxu0 0
    %344 = vmatpush2.bf16.msra.mxu0 0
    %345 = vmatprep.subr.bf16.mxu0 0
    %346 = vmatpush2.bf16.msra.mxu0 0
    %347 = vmatprep.subr.bf16.mxu0 0
    %348 = vmatpush2.bf16.msra.mxu0 0
    %349 = vmatprep.subr.bf16.mxu0 0
    %350 = vmatpush2.bf16.msra.mxu0 0
    %351 = vmatprep.subr.bf16.mxu0 0
    %352 = vmatpush2.bf16.msra.mxu0 0
    %353 = vmatprep.subr.bf16.mxu0 0
    %354 = vmatpush2.bf16.msra.mxu0 0
    %355 = vmatprep.subr.bf16.mxu0 0
    %356 = vmatpush2.bf16.msra.mxu0 0
    %357 = vmatprep.mubr.bf16.mxu0 0
    %358 = vmatmul.mubr.bf16.gmra.mxu0 %v319
    %v359 = vpop.f32.mrf.mxu0
    %v360 = vadd.f32 0.0, %v359
    %v361 = vpop.f32.mrf.mxu0
    %v362 = vpop.f32.mrf.mxu0
    %v363 = vpop.f32.mrf.mxu0
    %364 = vdwg.mxu0
    %365 = vrot.lane.b32.xlu0 %v190, 64
    %v366 = vpop.permute.xlu0 %365
    %v368 = vsel %vm194, %v315, 0
    %v371 = vsel %vm321, %v366, 0
    %373 = vmatprep.subr.bf16.mxu0 0
    %374 = vmatpush1.bf16.msra.mxu0 0
    %375 = vmatprep.subr.bf16.mxu0 0
    %376 = vmatpush1.bf16.msra.mxu0 0
    %377 = vmatprep.subr.bf16.mxu0 0
    %378 = vmatpush1.bf16.msra.mxu0 0
    %379 = vmatprep.subr.bf16.mxu0 0
    %380 = vmatpush1.bf16.msra.mxu0 0
    %381 = vmatprep.subr.bf16.mxu0 0
    %382 = vmatpush1.bf16.msra.mxu0 0
    %383 = vmatprep.subr.bf16.mxu0 0
    %384 = vmatpush1.bf16.msra.mxu0 0
    %385 = vmatprep.subr.bf16.mxu0 0
    %386 = vmatpush1.bf16.msra.mxu0 0
    %387 = vmatprep.subr.bf16.mxu0 0
    %388 = vmatpush1.bf16.msra.mxu0 %v371
    %389 = vmatprep.subr.bf16.mxu0 0
    %390 = vmatpush2.bf16.msra.mxu0 0
    %391 = vmatprep.subr.bf16.mxu0 0
    %392 = vmatpush2.bf16.msra.mxu0 0
    %393 = vmatprep.subr.bf16.mxu0 0
    %394 = vmatpush2.bf16.msra.mxu0 0
    %395 = vmatprep.subr.bf16.mxu0 0
    %396 = vmatpush2.bf16.msra.mxu0 0
    %397 = vmatprep.subr.bf16.mxu0 0
    %398 = vmatpush2.bf16.msra.mxu0 0
    %399 = vmatprep.subr.bf16.mxu0 0
    %400 = vmatpush2.bf16.msra.mxu0 0
    %401 = vmatprep.subr.bf16.mxu0 0
    %402 = vmatpush2.bf16.msra.mxu0 0
    %403 = vmatprep.subr.bf16.mxu0 0
    %404 = vmatpush2.bf16.msra.mxu0 0
    %405 = vmatprep.mubr.bf16.mxu0 0
    %406 = vmatmul.mubr.bf16.gmra.mxu0 %v368
    %v407 = vpop.f32.mrf.mxu0
    %v408 = vadd.f32 0.0, %v407
    %v409 = vpop.f32.mrf.mxu0
    %v410 = vpop.f32.mrf.mxu0
    %v411 = vpop.f32.mrf.mxu0
    %412 = vdwg.mxu0
    %413 = vrot.lane.b32.xlu0 %v189, 120
    %v414 = vpop.permute.xlu0 %413
    %415 = vrot.lane.b32.xlu0 %v189, 88
    %v416 = vpop.permute.xlu0 %415
    %v418 = vsel %vm194, %v414, 0
    %v421 = vsel %vm194, %v416, 0
    %423 = vmatprep.subr.bf16.mxu0 0
    %424 = vmatpush1.bf16.xpose.msra.mxu0 0
    %425 = vmatprep.subr.bf16.mxu0 0
    %426 = vmatpush1.bf16.xpose.msra.mxu0 0
    %427 = vmatprep.subr.bf16.mxu0 0
    %428 = vmatpush1.bf16.xpose.msra.mxu0 0
    %429 = vmatprep.subr.bf16.mxu0 0
    %430 = vmatpush1.bf16.xpose.msra.mxu0 0
    %431 = vmatprep.subr.bf16.mxu0 0
    %432 = vmatpush1.bf16.xpose.msra.mxu0 0
    %433 = vmatprep.subr.bf16.mxu0 0
    %434 = vmatpush1.bf16.xpose.msra.mxu0 0
    %435 = vmatprep.subr.bf16.mxu0 0
    %436 = vmatpush1.bf16.xpose.msra.mxu0 0
    %437 = vmatprep.subr.bf16.mxu0 0
    %438 = vmatpush1.bf16.xpose.msra.mxu0 %v421
    %439 = vmatprep.subr.bf16.mxu0 0
    %440 = vmatpush2.bf16.xpose.msra.mxu0 0
    %441 = vmatprep.subr.bf16.mxu0 0
    %442 = vmatpush2.bf16.xpose.msra.mxu0 0
    %443 = vmatprep.subr.bf16.mxu0 0
    %444 = vmatpush2.bf16.xpose.msra.mxu0 0
    %445 = vmatprep.subr.bf16.mxu0 0
    %446 = vmatpush2.bf16.xpose.msra.mxu0 0
    %447 = vmatprep.subr.bf16.mxu0 0
    %448 = vmatpush2.bf16.xpose.msra.mxu0 0
    %449 = vmatprep.subr.bf16.mxu0 0
    %450 = vmatpush2.bf16.xpose.msra.mxu0 0
    %451 = vmatprep.subr.bf16.mxu0 0
    %452 = vmatpush2.bf16.xpose.msra.mxu0 0
    %453 = vmatprep.subr.bf16.mxu0 0
    %454 = vmatpush2.bf16.xpose.msra.mxu0 0
    %455 = vmatprep.mubr.bf16.mxu0 0
    %456 = vmatmul.mubr.bf16.gmra.mxu0 %v418
    %v457 = vpop.f32.mrf.mxu0
    %v458 = vadd.f32 0.0, %v457
    %v459 = vpop.f32.mrf.mxu0
    %v460 = vpop.f32.mrf.mxu0
    %v461 = vpop.f32.mrf.mxu0
    %462 = vdwg.mxu0
    %463 = vrot.lane.b32.xlu0 %v190, 120
    %v464 = vpop.permute.xlu0 %463
    %465 = vrot.lane.b32.xlu0 %v190, 88
    %v466 = vpop.permute.xlu0 %465
    %v468 = vsel %vm194, %v464, 0
    %v471 = vsel %vm194, %v466, 0
    %473 = vmatprep.subr.bf16.mxu0 0
    %474 = vmatpush1.bf16.xpose.msra.mxu0 0
    %475 = vmatprep.subr.bf16.mxu0 0
    %476 = vmatpush1.bf16.xpose.msra.mxu0 0
    %477 = vmatprep.subr.bf16.mxu0 0
    %478 = vmatpush1.bf16.xpose.msra.mxu0 0
    %479 = vmatprep.subr.bf16.mxu0 0
    %480 = vmatpush1.bf16.xpose.msra.mxu0 0
    %481 = vmatprep.subr.bf16.mxu0 0
    %482 = vmatpush1.bf16.xpose.msra.mxu0 0
    %483 = vmatprep.subr.bf16.mxu0 0
    %484 = vmatpush1.bf16.xpose.msra.mxu0 0
    %485 = vmatprep.subr.bf16.mxu0 0
    %486 = vmatpush1.bf16.xpose.msra.mxu0 0
    %487 = vmatprep.subr.bf16.mxu0 0
    %488 = vmatpush1.bf16.xpose.msra.mxu0 %v471
    %489 = vmatprep.subr.bf16.mxu0 0
    %490 = vmatpush2.bf16.xpose.msra.mxu0 0
    %491 = vmatprep.subr.bf16.mxu0 0
    %492 = vmatpush2.bf16.xpose.msra.mxu0 0
    %493 = vmatprep.subr.bf16.mxu0 0
    %494 = vmatpush2.bf16.xpose.msra.mxu0 0
    %495 = vmatprep.subr.bf16.mxu0 0
    %496 = vmatpush2.bf16.xpose.msra.mxu0 0
    %497 = vmatprep.subr.bf16.mxu0 0
    %498 = vmatpush2.bf16.xpose.msra.mxu0 0
    %499 = vmatprep.subr.bf16.mxu0 0
    %500 = vmatpush2.bf16.xpose.msra.mxu0 0
    %501 = vmatprep.subr.bf16.mxu0 0
    %502 = vmatpush2.bf16.xpose.msra.mxu0 0
    %503 = vmatprep.subr.bf16.mxu0 0
    %504 = vmatpush2.bf16.xpose.msra.mxu0 0
    %505 = vmatprep.mubr.bf16.mxu0 0
    %506 = vmatmul.mubr.bf16.gmra.mxu0 %v468
    %v507 = vpop.f32.mrf.mxu0
    %v508 = vadd.f32 0.0, %v507
    %v509 = vpop.f32.mrf.mxu0
    %v510 = vpop.f32.mrf.mxu0
    %v511 = vpop.f32.mrf.mxu0
    %512 = vdwg.mxu0
    %v513 = vmul.f32 %v458, 0.35355338
    %v514 = vmul.f32 %v508, 0.35355338
    %v515 = vsel %vm194, %v513, -inf
    %516 = vmax.xlane.f32.xlu0 %v515
    %v517 = vpop.xlane.xlu0 %516
    %v518 = vsel %vm194, %v514, -inf
    %519 = vmax.xlane.f32.xlu0 %v518
    %v520 = vpop.xlane.xlu0 %519
    %v521 = vsub.f32 %v513, %v517
    %v522 = vsub.f32 %v514, %v520
    %v523 = vmul.f32 %v521, 1.442695
    %v524 = vpow.pop %v523
    %v525 = vmul.f32 %v522, 1.442695
    %v526 = vpow.pop %v525
    %v527 = vsel %vm194, %v524, 0.0
    %528 = vadd.xlane.f32.xlu0 %v527
    %v529 = vpop.xlane.xlu0 %528
    %v530 = vsel %vm194, %v526, 0.0
    %531 = vadd.xlane.f32.xlu0 %v530
    %v532 = vpop.xlane.xlu0 %531
    %v533 = vrcp.pop %v529
    %v534 = vrcp.pop %v532
    %v535 = vmul.f32 %v524, %v533
    %v536 = vmul.f32 %v526, %v534
    %v537 = vpack.c.bf16 %v535, %v535
    %v538 = vpack.c.bf16 %v536, %v536
    %539 = vrot.lane.b32.xlu0 %v189, 56
    %v540 = vpop.permute.xlu0 %539
    %v542 = vsel %vm194, %v537, 0
    %v545 = vsel %vm321, %v540, 0
    %547 = vmatprep.subr.bf16.mxu0 0
    %548 = vmatpush1.bf16.msra.mxu0 0
    %549 = vmatprep.subr.bf16.mxu0 0
    %550 = vmatpush1.bf16.msra.mxu0 0
    %551 = vmatprep.subr.bf16.mxu0 0
    %552 = vmatpush1.bf16.msra.mxu0 0
    %553 = vmatprep.subr.bf16.mxu0 0
    %554 = vmatpush1.bf16.msra.mxu0 0
    %555 = vmatprep.subr.bf16.mxu0 0
    %556 = vmatpush1.bf16.msra.mxu0 0
    %557 = vmatprep.subr.bf16.mxu0 0
    %558 = vmatpush1.bf16.msra.mxu0 0
    %559 = vmatprep.subr.bf16.mxu0 0
    %560 = vmatpush1.bf16.msra.mxu0 0
    %561 = vmatprep.subr.bf16.mxu0 0
    %562 = vmatpush1.bf16.msra.mxu0 %v545
    %563 = vmatprep.subr.bf16.mxu0 0
    %564 = vmatpush2.bf16.msra.mxu0 0
    %565 = vmatprep.subr.bf16.mxu0 0
    %566 = vmatpush2.bf16.msra.mxu0 0
    %567 = vmatprep.subr.bf16.mxu0 0
    %568 = vmatpush2.bf16.msra.mxu0 0
    %569 = vmatprep.subr.bf16.mxu0 0
    %570 = vmatpush2.bf16.msra.mxu0 0
    %571 = vmatprep.subr.bf16.mxu0 0
    %572 = vmatpush2.bf16.msra.mxu0 0
    %573 = vmatprep.subr.bf16.mxu0 0
    %574 = vmatpush2.bf16.msra.mxu0 0
    %575 = vmatprep.subr.bf16.mxu0 0
    %576 = vmatpush2.bf16.msra.mxu0 0
    %577 = vmatprep.subr.bf16.mxu0 0
    %578 = vmatpush2.bf16.msra.mxu0 0
    %579 = vmatprep.mubr.bf16.mxu0 0
    %580 = vmatmul.mubr.bf16.gmra.mxu0 %v542
    %v581 = vpop.f32.mrf.mxu0
    %v582 = vadd.f32 0.0, %v581
    %v583 = vpop.f32.mrf.mxu0
    %v584 = vpop.f32.mrf.mxu0
    %v585 = vpop.f32.mrf.mxu0
    %586 = vdwg.mxu0
    %587 = vrot.lane.b32.xlu0 %v190, 56
    %v588 = vpop.permute.xlu0 %587
    %v590 = vsel %vm194, %v538, 0
    %v593 = vsel %vm321, %v588, 0
    %595 = vmatprep.subr.bf16.mxu0 0
    %596 = vmatpush1.bf16.msra.mxu0 0
    %597 = vmatprep.subr.bf16.mxu0 0
    %598 = vmatpush1.bf16.msra.mxu0 0
    %599 = vmatprep.subr.bf16.mxu0 0
    %600 = vmatpush1.bf16.msra.mxu0 0
    %601 = vmatprep.subr.bf16.mxu0 0
    %602 = vmatpush1.bf16.msra.mxu0 0
    %603 = vmatprep.subr.bf16.mxu0 0
    %604 = vmatpush1.bf16.msra.mxu0 0
    %605 = vmatprep.subr.bf16.mxu0 0
    %606 = vmatpush1.bf16.msra.mxu0 0
    %607 = vmatprep.subr.bf16.mxu0 0
    %608 = vmatpush1.bf16.msra.mxu0 0
    %609 = vmatprep.subr.bf16.mxu0 0
    %610 = vmatpush1.bf16.msra.mxu0 %v593
    %611 = vmatprep.subr.bf16.mxu0 0
    %612 = vmatpush2.bf16.msra.mxu0 0
    %613 = vmatprep.subr.bf16.mxu0 0
    %614 = vmatpush2.bf16.msra.mxu0 0
    %615 = vmatprep.subr.bf16.mxu0 0
    %616 = vmatpush2.bf16.msra.mxu0 0
    %617 = vmatprep.subr.bf16.mxu0 0
    %618 = vmatpush2.bf16.msra.mxu0 0
    %619 = vmatprep.subr.bf16.mxu0 0
    %620 = vmatpush2.bf16.msra.mxu0 0
    %621 = vmatprep.subr.bf16.mxu0 0
    %622 = vmatpush2.bf16.msra.mxu0 0
    %623 = vmatprep.subr.bf16.mxu0 0
    %624 = vmatpush2.bf16.msra.mxu0 0
    %625 = vmatprep.subr.bf16.mxu0 0
    %626 = vmatpush2.bf16.msra.mxu0 0
    %627 = vmatprep.mubr.bf16.mxu0 0
    %628 = vmatmul.mubr.bf16.gmra.mxu0 %v590
    %v629 = vpop.f32.mrf.mxu0
    %v630 = vadd.f32 0.0, %v629
    %v631 = vpop.f32.mrf.mxu0
    %v632 = vpop.f32.mrf.mxu0
    %v633 = vpop.f32.mrf.mxu0
    %634 = vdwg.mxu0
    %635 = vrot.lane.b32.xlu0 %v189, 112
    %v636 = vpop.permute.xlu0 %635
    %637 = vrot.lane.b32.xlu0 %v189, 80
    %v638 = vpop.permute.xlu0 %637
    %v640 = vsel %vm194, %v636, 0
    %v643 = vsel %vm194, %v638, 0
    %645 = vmatprep.subr.bf16.mxu0 0
    %646 = vmatpush1.bf16.xpose.msra.mxu0 0
    %647 = vmatprep.subr.bf16.mxu0 0
    %648 = vmatpush1.bf16.xpose.msra.mxu0 0
    %649 = vmatprep.subr.bf16.mxu0 0
    %650 = vmatpush1.bf16.xpose.msra.mxu0 0
    %651 = vmatprep.subr.bf16.mxu0 0
    %652 = vmatpush1.bf16.xpose.msra.mxu0 0
    %653 = vmatprep.subr.bf16.mxu0 0
    %654 = vmatpush1.bf16.xpose.msra.mxu0 0
    %655 = vmatprep.subr.bf16.mxu0 0
    %656 = vmatpush1.bf16.xpose.msra.mxu0 0
    %657 = vmatprep.subr.bf16.mxu0 0
    %658 = vmatpush1.bf16.xpose.msra.mxu0 0
    %659 = vmatprep.subr.bf16.mxu0 0
    %660 = vmatpush1.bf16.xpose.msra.mxu0 %v643
    %661 = vmatprep.subr.bf16.mxu0 0
    %662 = vmatpush2.bf16.xpose.msra.mxu0 0
    %663 = vmatprep.subr.bf16.mxu0 0
    %664 = vmatpush2.bf16.xpose.msra.mxu0 0
    %665 = vmatprep.subr.bf16.mxu0 0
    %666 = vmatpush2.bf16.xpose.msra.mxu0 0
    %667 = vmatprep.subr.bf16.mxu0 0
    %668 = vmatpush2.bf16.xpose.msra.mxu0 0
    %669 = vmatprep.subr.bf16.mxu0 0
    %670 = vmatpush2.bf16.xpose.msra.mxu0 0
    %671 = vmatprep.subr.bf16.mxu0 0
    %672 = vmatpush2.bf16.xpose.msra.mxu0 0
    %673 = vmatprep.subr.bf16.mxu0 0
    %674 = vmatpush2.bf16.xpose.msra.mxu0 0
    %675 = vmatprep.subr.bf16.mxu0 0
    %676 = vmatpush2.bf16.xpose.msra.mxu0 0
    %677 = vmatprep.mubr.bf16.mxu0 0
    %678 = vmatmul.mubr.bf16.gmra.mxu0 %v640
    %v679 = vpop.f32.mrf.mxu0
    %v680 = vadd.f32 0.0, %v679
    %v681 = vpop.f32.mrf.mxu0
    %v682 = vpop.f32.mrf.mxu0
    %v683 = vpop.f32.mrf.mxu0
    %684 = vdwg.mxu0
    %685 = vrot.lane.b32.xlu0 %v190, 112
    %v686 = vpop.permute.xlu0 %685
    %687 = vrot.lane.b32.xlu0 %v190, 80
    %v688 = vpop.permute.xlu0 %687
    %v690 = vsel %vm194, %v686, 0
    %v693 = vsel %vm194, %v688, 0
    %695 = vmatprep.subr.bf16.mxu0 0
    %696 = vmatpush1.bf16.xpose.msra.mxu0 0
    %697 = vmatprep.subr.bf16.mxu0 0
    %698 = vmatpush1.bf16.xpose.msra.mxu0 0
    %699 = vmatprep.subr.bf16.mxu0 0
    %700 = vmatpush1.bf16.xpose.msra.mxu0 0
    %701 = vmatprep.subr.bf16.mxu0 0
    %702 = vmatpush1.bf16.xpose.msra.mxu0 0
    %703 = vmatprep.subr.bf16.mxu0 0
    %704 = vmatpush1.bf16.xpose.msra.mxu0 0
    %705 = vmatprep.subr.bf16.mxu0 0
    %706 = vmatpush1.bf16.xpose.msra.mxu0 0
    %707 = vmatprep.subr.bf16.mxu0 0
    %708 = vmatpush1.bf16.xpose.msra.mxu0 0
    %709 = vmatprep.subr.bf16.mxu0 0
    %710 = vmatpush1.bf16.xpose.msra.mxu0 %v693
    %711 = vmatprep.subr.bf16.mxu0 0
    %712 = vmatpush2.bf16.xpose.msra.mxu0 0
    %713 = vmatprep.subr.bf16.mxu0 0
    %714 = vmatpush2.bf16.xpose.msra.mxu0 0
    %715 = vmatprep.subr.bf16.mxu0 0
    %716 = vmatpush2.bf16.xpose.msra.mxu0 0
    %717 = vmatprep.subr.bf16.mxu0 0
    %718 = vmatpush2.bf16.xpose.msra.mxu0 0
    %719 = vmatprep.subr.bf16.mxu0 0
    %720 = vmatpush2.bf16.xpose.msra.mxu0 0
    %721 = vmatprep.subr.bf16.mxu0 0
    %722 = vmatpush2.bf16.xpose.msra.mxu0 0
    %723 = vmatprep.subr.bf16.mxu0 0
    %724 = vmatpush2.bf16.xpose.msra.mxu0 0
    %725 = vmatprep.subr.bf16.mxu0 0
    %726 = vmatpush2.bf16.xpose.msra.mxu0 0
    %727 = vmatprep.mubr.bf16.mxu0 0
    %728 = vmatmul.mubr.bf16.gmra.mxu0 %v690
    %v729 = vpop.f32.mrf.mxu0
    %v730 = vadd.f32 0.0, %v729
    %v731 = vpop.f32.mrf.mxu0
    %v732 = vpop.f32.mrf.mxu0
    %v733 = vpop.f32.mrf.mxu0
    %734 = vdwg.mxu0
    %v735 = vmul.f32 %v680, 0.35355338
    %v736 = vmul.f32 %v730, 0.35355338
    %v737 = vsel %vm194, %v735, -inf
    %738 = vmax.xlane.f32.xlu0 %v737
    %v739 = vpop.xlane.xlu0 %738
    %v740 = vsel %vm194, %v736, -inf
    %741 = vmax.xlane.f32.xlu0 %v740
    %v742 = vpop.xlane.xlu0 %741
    %v743 = vsub.f32 %v735, %v739
    %v744 = vsub.f32 %v736, %v742
    %v745 = vmul.f32 %v743, 1.442695
    %v746 = vpow.pop %v745
    %v747 = vmul.f32 %v744, 1.442695
    %v748 = vpow.pop %v747
    %v749 = vsel %vm194, %v746, 0.0
    %750 = vadd.xlane.f32.xlu0 %v749
    %v751 = vpop.xlane.xlu0 %750
    %v752 = vsel %vm194, %v748, 0.0
    %753 = vadd.xlane.f32.xlu0 %v752
    %v754 = vpop.xlane.xlu0 %753
    %v755 = vrcp.pop %v751
    %v756 = vrcp.pop %v754
    %v757 = vmul.f32 %v746, %v755
    %v758 = vmul.f32 %v748, %v756
    %v759 = vpack.c.bf16 %v757, %v757
    %v760 = vpack.c.bf16 %v758, %v758
    %761 = vrot.lane.b32.xlu0 %v189, 48
    %v762 = vpop.permute.xlu0 %761
    %v764 = vsel %vm194, %v759, 0
    %v767 = vsel %vm321, %v762, 0
    %769 = vmatprep.subr.bf16.mxu0 0
    %770 = vmatpush1.bf16.msra.mxu0 0
    %771 = vmatprep.subr.bf16.mxu0 0
    %772 = vmatpush1.bf16.msra.mxu0 0
    %773 = vmatprep.subr.bf16.mxu0 0
    %774 = vmatpush1.bf16.msra.mxu0 0
    %775 = vmatprep.subr.bf16.mxu0 0
    %776 = vmatpush1.bf16.msra.mxu0 0
    %777 = vmatprep.subr.bf16.mxu0 0
    %778 = vmatpush1.bf16.msra.mxu0 0
    %779 = vmatprep.subr.bf16.mxu0 0
    %780 = vmatpush1.bf16.msra.mxu0 0
    %781 = vmatprep.subr.bf16.mxu0 0
    %782 = vmatpush1.bf16.msra.mxu0 0
    %783 = vmatprep.subr.bf16.mxu0 0
    %784 = vmatpush1.bf16.msra.mxu0 %v767
    %785 = vmatprep.subr.bf16.mxu0 0
    %786 = vmatpush2.bf16.msra.mxu0 0
    %787 = vmatprep.subr.bf16.mxu0 0
    %788 = vmatpush2.bf16.msra.mxu0 0
    %789 = vmatprep.subr.bf16.mxu0 0
    %790 = vmatpush2.bf16.msra.mxu0 0
    %791 = vmatprep.subr.bf16.mxu0 0
    %792 = vmatpush2.bf16.msra.mxu0 0
    %793 = vmatprep.subr.bf16.mxu0 0
    %794 = vmatpush2.bf16.msra.mxu0 0
    %795 = vmatprep.subr.bf16.mxu0 0
    %796 = vmatpush2.bf16.msra.mxu0 0
    %797 = vmatprep.subr.bf16.mxu0 0
    %798 = vmatpush2.bf16.msra.mxu0 0
    %799 = vmatprep.subr.bf16.mxu0 0
    %800 = vmatpush2.bf16.msra.mxu0 0
    %801 = vmatprep.mubr.bf16.mxu0 0
    %802 = vmatmul.mubr.bf16.gmra.mxu0 %v764
    %v803 = vpop.f32.mrf.mxu0
    %v804 = vadd.f32 0.0, %v803
    %v805 = vpop.f32.mrf.mxu0
    %v806 = vpop.f32.mrf.mxu0
    %v807 = vpop.f32.mrf.mxu0
    %808 = vdwg.mxu0
    %809 = vrot.lane.b32.xlu0 %v190, 48
    %v810 = vpop.permute.xlu0 %809
    %v812 = vsel %vm194, %v760, 0
    %v815 = vsel %vm321, %v810, 0
    %817 = vmatprep.subr.bf16.mxu0 0
    %818 = vmatpush1.bf16.msra.mxu0 0
    %819 = vmatprep.subr.bf16.mxu0 0
    %820 = vmatpush1.bf16.msra.mxu0 0
    %821 = vmatprep.subr.bf16.mxu0 0
    %822 = vmatpush1.bf16.msra.mxu0 0
    %823 = vmatprep.subr.bf16.mxu0 0
    %824 = vmatpush1.bf16.msra.mxu0 0
    %825 = vmatprep.subr.bf16.mxu0 0
    %826 = vmatpush1.bf16.msra.mxu0 0
    %827 = vmatprep.subr.bf16.mxu0 0
    %828 = vmatpush1.bf16.msra.mxu0 0
    %829 = vmatprep.subr.bf16.mxu0 0
    %830 = vmatpush1.bf16.msra.mxu0 0
    %831 = vmatprep.subr.bf16.mxu0 0
    %832 = vmatpush1.bf16.msra.mxu0 %v815
    %833 = vmatprep.subr.bf16.mxu0 0
    %834 = vmatpush2.bf16.msra.mxu0 0
    %835 = vmatprep.subr.bf16.mxu0 0
    %836 = vmatpush2.bf16.msra.mxu0 0
    %837 = vmatprep.subr.bf16.mxu0 0
    %838 = vmatpush2.bf16.msra.mxu0 0
    %839 = vmatprep.subr.bf16.mxu0 0
    %840 = vmatpush2.bf16.msra.mxu0 0
    %841 = vmatprep.subr.bf16.mxu0 0
    %842 = vmatpush2.bf16.msra.mxu0 0
    %843 = vmatprep.subr.bf16.mxu0 0
    %844 = vmatpush2.bf16.msra.mxu0 0
    %845 = vmatprep.subr.bf16.mxu0 0
    %846 = vmatpush2.bf16.msra.mxu0 0
    %847 = vmatprep.subr.bf16.mxu0 0
    %848 = vmatpush2.bf16.msra.mxu0 0
    %849 = vmatprep.mubr.bf16.mxu0 0
    %850 = vmatmul.mubr.bf16.gmra.mxu0 %v812
    %v851 = vpop.f32.mrf.mxu0
    %v852 = vadd.f32 0.0, %v851
    %v853 = vpop.f32.mrf.mxu0
    %v854 = vpop.f32.mrf.mxu0
    %v855 = vpop.f32.mrf.mxu0
    %856 = vdwg.mxu0
    %857 = vrot.lane.b32.xlu0 %v189, 104
    %v858 = vpop.permute.xlu0 %857
    %859 = vrot.lane.b32.xlu0 %v189, 72
    %v860 = vpop.permute.xlu0 %859
    %v862 = vsel %vm194, %v858, 0
    %v865 = vsel %vm194, %v860, 0
    %867 = vmatprep.subr.bf16.mxu0 0
    %868 = vmatpush1.bf16.xpose.msra.mxu0 0
    %869 = vmatprep.subr.bf16.mxu0 0
    %870 = vmatpush1.bf16.xpose.msra.mxu0 0
    %871 = vmatprep.subr.bf16.mxu0 0
    %872 = vmatpush1.bf16.xpose.msra.mxu0 0
    %873 = vmatprep.subr.bf16.mxu0 0
    %874 = vmatpush1.bf16.xpose.msra.mxu0 0
    %875 = vmatprep.subr.bf16.mxu0 0
    %876 = vmatpush1.bf16.xpose.msra.mxu0 0
    %877 = vmatprep.subr.bf16.mxu0 0
    %878 = vmatpush1.bf16.xpose.msra.mxu0 0
    %879 = vmatprep.subr.bf16.mxu0 0
    %880 = vmatpush1.bf16.xpose.msra.mxu0 0
    %881 = vmatprep.subr.bf16.mxu0 0
    %882 = vmatpush1.bf16.xpose.msra.mxu0 %v865
    %883 = vmatprep.subr.bf16.mxu0 0
    %884 = vmatpush2.bf16.xpose.msra.mxu0 0
    %885 = vmatprep.subr.bf16.mxu0 0
    %886 = vmatpush2.bf16.xpose.msra.mxu0 0
    %887 = vmatprep.subr.bf16.mxu0 0
    %888 = vmatpush2.bf16.xpose.msra.mxu0 0
    %889 = vmatprep.subr.bf16.mxu0 0
    %890 = vmatpush2.bf16.xpose.msra.mxu0 0
    %891 = vmatprep.subr.bf16.mxu0 0
    %892 = vmatpush2.bf16.xpose.msra.mxu0 0
    %893 = vmatprep.subr.bf16.mxu0 0
    %894 = vmatpush2.bf16.xpose.msra.mxu0 0
    %895 = vmatprep.subr.bf16.mxu0 0
    %896 = vmatpush2.bf16.xpose.msra.mxu0 0
    %897 = vmatprep.subr.bf16.mxu0 0
    %898 = vmatpush2.bf16.xpose.msra.mxu0 0
    %899 = vmatprep.mubr.bf16.mxu0 0
    %900 = vmatmul.mubr.bf16.gmra.mxu0 %v862
    %v901 = vpop.f32.mrf.mxu0
    %v902 = vadd.f32 0.0, %v901
    %v903 = vpop.f32.mrf.mxu0
    %v904 = vpop.f32.mrf.mxu0
    %v905 = vpop.f32.mrf.mxu0
    %906 = vdwg.mxu0
    %907 = vrot.lane.b32.xlu0 %v190, 104
    %v908 = vpop.permute.xlu0 %907
    %909 = vrot.lane.b32.xlu0 %v190, 72
    %v910 = vpop.permute.xlu0 %909
    %v912 = vsel %vm194, %v908, 0
    %v915 = vsel %vm194, %v910, 0
    %917 = vmatprep.subr.bf16.mxu0 0
    %918 = vmatpush1.bf16.xpose.msra.mxu0 0
    %919 = vmatprep.subr.bf16.mxu0 0
    %920 = vmatpush1.bf16.xpose.msra.mxu0 0
    %921 = vmatprep.subr.bf16.mxu0 0
    %922 = vmatpush1.bf16.xpose.msra.mxu0 0
    %923 = vmatprep.subr.bf16.mxu0 0
    %924 = vmatpush1.bf16.xpose.msra.mxu0 0
    %925 = vmatprep.subr.bf16.mxu0 0
    %926 = vmatpush1.bf16.xpose.msra.mxu0 0
    %927 = vmatprep.subr.bf16.mxu0 0
    %928 = vmatpush1.bf16.xpose.msra.mxu0 0
    %929 = vmatprep.subr.bf16.mxu0 0
    %930 = vmatpush1.bf16.xpose.msra.mxu0 0
    %931 = vmatprep.subr.bf16.mxu0 0
    %932 = vmatpush1.bf16.xpose.msra.mxu0 %v915
    %933 = vmatprep.subr.bf16.mxu0 0
    %934 = vmatpush2.bf16.xpose.msra.mxu0 0
    %935 = vmatprep.subr.bf16.mxu0 0
    %936 = vmatpush2.bf16.xpose.msra.mxu0 0
    %937 = vmatprep.subr.bf16.mxu0 0
    %938 = vmatpush2.bf16.xpose.msra.mxu0 0
    %939 = vmatprep.subr.bf16.mxu0 0
    %940 = vmatpush2.bf16.xpose.msra.mxu0 0
    %941 = vmatprep.subr.bf16.mxu0 0
    %942 = vmatpush2.bf16.xpose.msra.mxu0 0
    %943 = vmatprep.subr.bf16.mxu0 0
    %944 = vmatpush2.bf16.xpose.msra.mxu0 0
    %945 = vmatprep.subr.bf16.mxu0 0
    %946 = vmatpush2.bf16.xpose.msra.mxu0 0
    %947 = vmatprep.subr.bf16.mxu0 0
    %948 = vmatpush2.bf16.xpose.msra.mxu0 0
    %949 = vmatprep.mubr.bf16.mxu0 0
    %950 = vmatmul.mubr.bf16.gmra.mxu0 %v912
    %v951 = vpop.f32.mrf.mxu0
    %v952 = vadd.f32 0.0, %v951
    %v953 = vpop.f32.mrf.mxu0
    %v954 = vpop.f32.mrf.mxu0
    %v955 = vpop.f32.mrf.mxu0
    %956 = vdwg.mxu0
    %v957 = vmul.f32 %v902, 0.35355338
    %v958 = vmul.f32 %v952, 0.35355338
    %v959 = vsel %vm194, %v957, -inf
    %960 = vmax.xlane.f32.xlu0 %v959
    %v961 = vpop.xlane.xlu0 %960
    %v962 = vsel %vm194, %v958, -inf
    %963 = vmax.xlane.f32.xlu0 %v962
    %v964 = vpop.xlane.xlu0 %963
    %v965 = vsub.f32 %v957, %v961
    %v966 = vsub.f32 %v958, %v964
    %v967 = vmul.f32 %v965, 1.442695
    %v968 = vpow.pop %v967
    %v969 = vmul.f32 %v966, 1.442695
    %v970 = vpow.pop %v969
    %v971 = vsel %vm194, %v968, 0.0
    %972 = vadd.xlane.f32.xlu0 %v971
    %v973 = vpop.xlane.xlu0 %972
    %v974 = vsel %vm194, %v970, 0.0
    %975 = vadd.xlane.f32.xlu0 %v974
    %v976 = vpop.xlane.xlu0 %975
    %v977 = vrcp.pop %v973
    %v978 = vrcp.pop %v976
    %v979 = vmul.f32 %v968, %v977
    %v980 = vmul.f32 %v970, %v978
    %v981 = vpack.c.bf16 %v979, %v979
    %v982 = vpack.c.bf16 %v980, %v980
    %983 = vrot.lane.b32.xlu0 %v189, 40
    %v984 = vpop.permute.xlu0 %983
    %v986 = vsel %vm194, %v981, 0
    %v989 = vsel %vm321, %v984, 0
    %991 = vmatprep.subr.bf16.mxu0 0
    %992 = vmatpush1.bf16.msra.mxu0 0
    %993 = vmatprep.subr.bf16.mxu0 0
    %994 = vmatpush1.bf16.msra.mxu0 0
    %995 = vmatprep.subr.bf16.mxu0 0
    %996 = vmatpush1.bf16.msra.mxu0 0
    %997 = vmatprep.subr.bf16.mxu0 0
    %998 = vmatpush1.bf16.msra.mxu0 0
    %999 = vmatprep.subr.bf16.mxu0 0
    %1000 = vmatpush1.bf16.msra.mxu0 0
    %1001 = vmatprep.subr.bf16.mxu0 0
    %1002 = vmatpush1.bf16.msra.mxu0 0
    %1003 = vmatprep.subr.bf16.mxu0 0
    %1004 = vmatpush1.bf16.msra.mxu0 0
    %1005 = vmatprep.subr.bf16.mxu0 0
    %1006 = vmatpush1.bf16.msra.mxu0 %v989
    %1007 = vmatprep.subr.bf16.mxu0 0
    %1008 = vmatpush2.bf16.msra.mxu0 0
    %1009 = vmatprep.subr.bf16.mxu0 0
    %1010 = vmatpush2.bf16.msra.mxu0 0
    %1011 = vmatprep.subr.bf16.mxu0 0
    %1012 = vmatpush2.bf16.msra.mxu0 0
    %1013 = vmatprep.subr.bf16.mxu0 0
    %1014 = vmatpush2.bf16.msra.mxu0 0
    %1015 = vmatprep.subr.bf16.mxu0 0
    %1016 = vmatpush2.bf16.msra.mxu0 0
    %1017 = vmatprep.subr.bf16.mxu0 0
    %1018 = vmatpush2.bf16.msra.mxu0 0
    %1019 = vmatprep.subr.bf16.mxu0 0
    %1020 = vmatpush2.bf16.msra.mxu0 0
    %1021 = vmatprep.subr.bf16.mxu0 0
    %1022 = vmatpush2.bf16.msra.mxu0 0
    %1023 = vmatprep.mubr.bf16.mxu0 0
    %1024 = vmatmul.mubr.bf16.gmra.mxu0 %v986
    %v1025 = vpop.f32.mrf.mxu0
    %v1026 = vadd.f32 0.0, %v1025
    %v1027 = vpop.f32.mrf.mxu0
    %v1028 = vpop.f32.mrf.mxu0
    %v1029 = vpop.f32.mrf.mxu0
    %1030 = vdwg.mxu0
    %1031 = vrot.lane.b32.xlu0 %v190, 40
    %v1032 = vpop.permute.xlu0 %1031
    %v1034 = vsel %vm194, %v982, 0
    %v1037 = vsel %vm321, %v1032, 0
    %1039 = vmatprep.subr.bf16.mxu0 0
    %1040 = vmatpush1.bf16.msra.mxu0 0
    %1041 = vmatprep.subr.bf16.mxu0 0
    %1042 = vmatpush1.bf16.msra.mxu0 0
    %1043 = vmatprep.subr.bf16.mxu0 0
    %1044 = vmatpush1.bf16.msra.mxu0 0
    %1045 = vmatprep.subr.bf16.mxu0 0
    %1046 = vmatpush1.bf16.msra.mxu0 0
    %1047 = vmatprep.subr.bf16.mxu0 0
    %1048 = vmatpush1.bf16.msra.mxu0 0
    %1049 = vmatprep.subr.bf16.mxu0 0
    %1050 = vmatpush1.bf16.msra.mxu0 0
    %1051 = vmatprep.subr.bf16.mxu0 0
    %1052 = vmatpush1.bf16.msra.mxu0 0
    %1053 = vmatprep.subr.bf16.mxu0 0
    %1054 = vmatpush1.bf16.msra.mxu0 %v1037
    %1055 = vmatprep.subr.bf16.mxu0 0
    %1056 = vmatpush2.bf16.msra.mxu0 0
    %1057 = vmatprep.subr.bf16.mxu0 0
    %1058 = vmatpush2.bf16.msra.mxu0 0
    %1059 = vmatprep.subr.bf16.mxu0 0
    %1060 = vmatpush2.bf16.msra.mxu0 0
    %1061 = vmatprep.subr.bf16.mxu0 0
    %1062 = vmatpush2.bf16.msra.mxu0 0
    %1063 = vmatprep.subr.bf16.mxu0 0
    %1064 = vmatpush2.bf16.msra.mxu0 0
    %1065 = vmatprep.subr.bf16.mxu0 0
    %1066 = vmatpush2.bf16.msra.mxu0 0
    %1067 = vmatprep.subr.bf16.mxu0 0
    %1068 = vmatpush2.bf16.msra.mxu0 0
    %1069 = vmatprep.subr.bf16.mxu0 0
    %1070 = vmatpush2.bf16.msra.mxu0 0
    %1071 = vmatprep.mubr.bf16.mxu0 0
    %1072 = vmatmul.mubr.bf16.gmra.mxu0 %v1034
    %v1073 = vpop.f32.mrf.mxu0
    %v1074 = vadd.f32 0.0, %v1073
    %v1075 = vpop.f32.mrf.mxu0
    %v1076 = vpop.f32.mrf.mxu0
    %v1077 = vpop.f32.mrf.mxu0
    %1078 = vdwg.mxu0
    %1081 = vrot.lane.b32.xlu0 %v582, 8
    %v1082 = vpop.permute.xlu0 %1081
    %1083 = vrot.lane.b32.xlu0 %v630, 8
    %v1084 = vpop.permute.xlu0 %1083
    %1089 = vrot.lane.b32.xlu0 %v804, 16
    %v1090 = vpop.permute.xlu0 %1089
    %1091 = vrot.lane.b32.xlu0 %v852, 16
    %v1092 = vpop.permute.xlu0 %1091
    %1097 = vrot.lane.b32.xlu0 %v1026, 24
    %v1098 = vpop.permute.xlu0 %1097
    %1099 = vrot.lane.b32.xlu0 %v1074, 24
    %v1100 = vpop.permute.xlu0 %1099
    %v1103 = vsel %vm194, %v360, %v1082
    %v1104 = vsel %vm194, %v408, %v1084
    %vm1105 = vcmask 130048
    %v1106 = vsel %vm1105, %v1103, %v1090
    %v1107 = vsel %vm1105, %v1104, %v1092
    %vm1108 = vcmask 195584
    %v1109 = vsel %vm1108, %v1106, %v1098
    %v1110 = vsel %vm1108, %v1107, %v1100
    %v1111 = vpack.c.bf16 %v1110, %v1109
    %v1112 = vld [vmem:[%s3] sm:$0xf]
    %v1113 = vld [vmem:[%s3 + $0x4] sm:$0xf]
    %v1114 = vld [vmem:[%s3 + $0x8] sm:$0xf]
    %v1115 = vld [vmem:[%s3 + $0xc] sm:$0xf]
    %v1116 = vld [vmem:[#allocation5] sm:$0x1]
    %v1118 = vlaneseq
    %v1119 = vshrl.u32 %v1118, 7
    %v1120 = vsub.s32 0, %v1119
    %v1121 = vrot.slane %v1116, %v1120
    %v1127 = vunpack.c.l.b16 %v1112
    %v1128 = vunpack.c.l.b16 %v1113
    %v1129 = vunpack.c.l.b16 %v1114
    %v1130 = vunpack.c.l.b16 %v1115
    %v1131 = vpack.c.b16 %v1128, %v1127
    %v1132 = vpack.c.b16 %v1130, %v1129
    %v1136 = vsel %vm144, %v1111, 0
    %1138 = vmatprep.subr.bf16.mxu0 0
    %1139 = vmatpush1.bf16.msra.mxu0 0
    %1140 = vmatprep.subr.bf16.mxu0 0
    %1141 = vmatpush1.bf16.msra.mxu0 0
    %1142 = vmatprep.subr.bf16.mxu0 0
    %1143 = vmatpush1.bf16.msra.mxu0 0
    %1144 = vmatprep.subr.bf16.mxu0 0
    %1145 = vmatpush1.bf16.msra.mxu0 0
    %1146 = vmatprep.subr.bf16.mxu0 0
    %1147 = vmatpush1.bf16.msra.mxu0 0
    %1148 = vmatprep.subr.bf16.mxu0 0
    %1149 = vmatpush1.bf16.msra.mxu0 0
    %1150 = vmatprep.subr.bf16.mxu0 0
    %1151 = vmatpush1.bf16.msra.mxu0 %v1132
    %1152 = vmatprep.subr.bf16.mxu0 0
    %1153 = vmatpush1.bf16.msra.mxu0 %v1131
    %1154 = vmatprep.subr.bf16.mxu0 0
    %1155 = vmatpush2.bf16.msra.mxu0 0
    %1156 = vmatprep.subr.bf16.mxu0 0
    %1157 = vmatpush2.bf16.msra.mxu0 0
    %1158 = vmatprep.subr.bf16.mxu0 0
    %1159 = vmatpush2.bf16.msra.mxu0 0
    %1160 = vmatprep.subr.bf16.mxu0 0
    %1161 = vmatpush2.bf16.msra.mxu0 0
    %1162 = vmatprep.subr.bf16.mxu0 0
    %1163 = vmatpush2.bf16.msra.mxu0 0
    %1164 = vmatprep.subr.bf16.mxu0 0
    %1165 = vmatpush2.bf16.msra.mxu0 0
    %1166 = vmatprep.subr.bf16.mxu0 0
    %1167 = vmatpush2.bf16.msra.mxu0 0
    %1168 = vmatprep.subr.bf16.mxu0 0
    %1169 = vmatpush2.bf16.msra.mxu0 0
    %1170 = vmatprep.mubr.bf16.mxu0 0
    %1171 = vmatmul.mubr.bf16.gmra.mxu0 %v1136
    %v1172 = vpop.f32.mrf.mxu0
    %v1173 = vadd.f32 %v1121, %v1172
    %v1174 = vpop.f32.mrf.mxu0
    %v1175 = vpop.f32.mrf.mxu0
    %v1176 = vadd.f32 %v1121, %v1175
    %v1177 = vpop.f32.mrf.mxu0
    %1178 = vdwg.mxu0
    %v1179 = vadd.f32 %v118, %v1173
    %v1180 = vadd.f32 %v119, %v1176
    %v1181 = vsel %vm144, %v1179, 0.0
    %1182 = vadd.xlane.f32.xlu0 %v1181
    %v1183 = vpop.xlane.xlu0 %1182
    %v1184 = vsel %vm144, %v1180, 0.0
    %1185 = vadd.xlane.f32.xlu0 %v1184
    %v1186 = vpop.xlane.xlu0 %1185
    %v1187 = vrcp.pop 32.0
    %v1188 = vmul.f32 %v1183, %v1187
    %v1189 = vmul.f32 %v1186, %v1187
    %v1190 = vsub.f32 %v1179, %v1188
    %v1191 = vsub.f32 %v1180, %v1189
    %v1192 = vmul.f32 %v1190, %v1190
    %v1193 = vmul.f32 %v1191, %v1191
    %v1194 = vsel %vm144, %v1192, 0.0
    %1195 = vadd.xlane.f32.xlu0 %v1194
    %v1196 = vpop.xlane.xlu0 %1195
    %v1197 = vsel %vm144, %v1193, 0.0
    %1198 = vadd.xlane.f32.xlu0 %v1197
    %v1199 = vpop.xlane.xlu0 %1198
    %v1200 = vmul.f32 %v1196, %v1187
    %v1201 = vmul.f32 %v1199, %v1187
    %v1202 = vadd.f32 %v1200, 1e-05
    %v1203 = vadd.f32 %v1201, 1e-05
    %v1204 = vrsqrt.pop %v1202
    %v1205 = vrsqrt.pop %v1203
    %v1206 = vmul.f32 %v1190, %v1204
    %v1207 = vmul.f32 %v1191, %v1205
    %v1208 = vld [vmem:[#allocation7] sm:$0x1]
    %v1210 = vlaneseq
    %v1211 = vshrl.u32 %v1210, 7
    %v1212 = vsub.s32 0, %v1211
    %v1213 = vrot.slane %v1208, %v1212
    %v1215 = vmul.f32 %v1206, %v1213
    %v1216 = vmul.f32 %v1207, %v1213
    %v1217 = vld [vmem:[#allocation8] sm:$0x1]
    %v1219 = vlaneseq
    %v1220 = vshrl.u32 %v1219, 7
    %v1221 = vsub.s32 0, %v1220
    %v1222 = vrot.slane %v1217, %v1221
    %v1224 = vadd.f32 %v1215, %v1222
    %v1225 = vadd.f32 %v1216, %v1222
    %v1226 = vpack.c.bf16 %v1225, %v1224
    %v1227 = vld [vmem:[#allocation10] sm:$0xf]
    %v1228 = vld [vmem:[#allocation10 + $0x4] sm:$0xf]
    %v1229 = vld [vmem:[#allocation10 + $0x8] sm:$0xf]
    %v1230 = vld [vmem:[#allocation10 + $0xc] sm:$0xf]
    %v1231 = vld [vmem:[#allocation11] sm:$0x1]
    %v1233 = vlaneseq
    %v1234 = vshrl.u32 %v1233, 7
    %v1235 = vsub.s32 0, %v1234
    %v1236 = vrot.slane %v1231, %v1235
    %v1242 = vunpack.c.l.b16 %v1227
    %v1243 = vunpack.c.l.b16 %v1228
    %v1244 = vunpack.c.l.b16 %v1229
    %v1245 = vunpack.c.l.b16 %v1230
    %v1246 = vpack.c.b16 %v1243, %v1242
    %v1247 = vpack.c.b16 %v1245, %v1244
    %v1251 = vsel %vm144, %v1226, 0
    %1253 = vmatprep.subr.bf16.mxu0 0
    %1254 = vmatpush1.bf16.msra.mxu0 0
    %1255 = vmatprep.subr.bf16.mxu0 0
    %1256 = vmatpush1.bf16.msra.mxu0 0
    %1257 = vmatprep.subr.bf16.mxu0 0
    %1258 = vmatpush1.bf16.msra.mxu0 0
    %1259 = vmatprep.subr.bf16.mxu0 0
    %1260 = vmatpush1.bf16.msra.mxu0 0
    %1261 = vmatprep.subr.bf16.mxu0 0
    %1262 = vmatpush1.bf16.msra.mxu0 0
    %1263 = vmatprep.subr.bf16.mxu0 0
    %1264 = vmatpush1.bf16.msra.mxu0 0
    %1265 = vmatprep.subr.bf16.mxu0 0
    %1266 = vmatpush1.bf16.msra.mxu0 %v1247
    %1267 = vmatprep.subr.bf16.mxu0 0
    %1268 = vmatpush1.bf16.msra.mxu0 %v1246
    %1269 = vmatprep.subr.bf16.mxu0 0
    %1270 = vmatpush2.bf16.msra.mxu0 0
    %1271 = vmatprep.subr.bf16.mxu0 0
    %1272 = vmatpush2.bf16.msra.mxu0 0
    %1273 = vmatprep.subr.bf16.mxu0 0
    %1274 = vmatpush2.bf16.msra.mxu0 0
    %1275 = vmatprep.subr.bf16.mxu0 0
    %1276 = vmatpush2.bf16.msra.mxu0 0
    %1277 = vmatprep.subr.bf16.mxu0 0
    %1278 = vmatpush2.bf16.msra.mxu0 0
    %1279 = vmatprep.subr.bf16.mxu0 0
    %1280 = vmatpush2.bf16.msra.mxu0 0
    %1281 = vmatprep.subr.bf16.mxu0 0
    %1282 = vmatpush2.bf16.msra.mxu0 0
    %1283 = vmatprep.subr.bf16.mxu0 0
    %1284 = vmatpush2.bf16.msra.mxu0 0
    %1285 = vmatprep.mubr.bf16.mxu0 0
    %1286 = vmatmul.mubr.bf16.gmra.mxu0 %v1251
    %v1287 = vpop.f32.mrf.mxu0
    %v1288 = vadd.f32 %v1236, %v1287
    %v1289 = vpop.f32.mrf.mxu0
    %v1290 = vpop.f32.mrf.mxu0
    %v1291 = vadd.f32 %v1236, %v1290
    %v1292 = vpop.f32.mrf.mxu0
    %1293 = vdwg.mxu0
    %v1294 = vmax.f32 %v1288, 0.0
    %v1295 = vmax.f32 %v1291, 0.0
    %v1296 = vpack.c.bf16 %v1295, %v1294
    %v1297 = vld [vmem:[%s9] sm:$0xf]
    %v1298 = vld [vmem:[%s9 + $0x4] sm:$0xf]
    %v1299 = vld [vmem:[%s9 + $0x8] sm:$0xf]
    %v1300 = vld [vmem:[%s9 + $0xc] sm:$0xf]
    %v1301 = vld [vmem:[%s9 + $0x10] sm:$0xf]
    %v1302 = vld [vmem:[%s9 + $0x14] sm:$0xf]
    %v1303 = vld [vmem:[%s9 + $0x18] sm:$0xf]
    %v1304 = vld [vmem:[%s9 + $0x1c] sm:$0xf]
    %v1305 = vld [vmem:[%s10] sm:$0x1]
    %v1307 = vlaneseq
    %v1308 = vshrl.u32 %v1307, 7
    %v1309 = vsub.s32 0, %v1308
    %v1310 = vrot.slane %v1305, %v1309
    %v1320 = vunpack.c.l.b16 %v1297
    %v1321 = vunpack.c.l.b16 %v1298
    %v1322 = vunpack.c.l.b16 %v1299
    %v1323 = vunpack.c.l.b16 %v1300
    %v1324 = vunpack.c.l.b16 %v1301
    %v1325 = vunpack.c.l.b16 %v1302
    %v1326 = vunpack.c.l.b16 %v1303
    %v1327 = vunpack.c.l.b16 %v1304
    %v1328 = vpack.c.b16 %v1321, %v1320
    %v1329 = vpack.c.b16 %v1323, %v1322
    %v1330 = vpack.c.b16 %v1325, %v1324
    %v1331 = vpack.c.b16 %v1327, %v1326
    %vm1336 = vcmask 523264
    %v1338 = vsel %vm1336, %v1296, 0
    %1340 = vmatprep.subr.bf16.mxu0 0
    %1341 = vmatpush1.bf16.msra.mxu0 0
    %1342 = vmatprep.subr.bf16.mxu0 0
    %1343 = vmatpush1.bf16.msra.mxu0 0
    %1344 = vmatprep.subr.bf16.mxu0 0
    %1345 = vmatpush1.bf16.msra.mxu0 0
    %1346 = vmatprep.subr.bf16.mxu0 0
    %1347 = vmatpush1.bf16.msra.mxu0 0
    %1348 = vmatprep.subr.bf16.mxu0 0
    %1349 = vmatpush1.bf16.msra.mxu0 %v1331
    %1350 = vmatprep.subr.bf16.mxu0 0
    %1351 = vmatpush1.bf16.msra.mxu0 %v1330
    %1352 = vmatprep.subr.bf16.mxu0 0
    %1353 = vmatpush1.bf16.msra.mxu0 %v1329
    %1354 = vmatprep.subr.bf16.mxu0 0
    %1355 = vmatpush1.bf16.msra.mxu0 %v1328
    %1356 = vmatprep.subr.bf16.mxu0 0
    %1357 = vmatpush2.bf16.msra.mxu0 0
    %1358 = vmatprep.subr.bf16.mxu0 0
    %1359 = vmatpush2.bf16.msra.mxu0 0
    %1360 = vmatprep.subr.bf16.mxu0 0
    %1361 = vmatpush2.bf16.msra.mxu0 0
    %1362 = vmatprep.subr.bf16.mxu0 0
    %1363 = vmatpush2.bf16.msra.mxu0 0
    %1364 = vmatprep.subr.bf16.mxu0 0
    %1365 = vmatpush2.bf16.msra.mxu0 0
    %1366 = vmatprep.subr.bf16.mxu0 0
    %1367 = vmatpush2.bf16.msra.mxu0 0
    %1368 = vmatprep.subr.bf16.mxu0 0
    %1369 = vmatpush2.bf16.msra.mxu0 0
    %1370 = vmatprep.subr.bf16.mxu0 0
    %1371 = vmatpush2.bf16.msra.mxu0 0
    %1372 = vmatprep.mubr.bf16.mxu0 0
    %1373 = vmatmul.mubr.bf16.gmra.mxu0 %v1338
    %v1374 = vpop.f32.mrf.mxu0
    %v1375 = vadd.f32 %v1310, %v1374
    %v1376 = vpop.f32.mrf.mxu0
    %v1377 = vpop.f32.mrf.mxu0
    %v1378 = vadd.f32 %v1310, %v1377
    %v1379 = vpop.f32.mrf.mxu0
    %1380 = vdwg.mxu0
    %v1381 = vadd.f32 %v1224, %v1375
    %v1382 = vadd.f32 %v1225, %v1378
    %v1383 = vsel %vm144, %v1381, 0.0
    %1384 = vadd.xlane.f32.xlu0 %v1383
    %v1385 = vpop.xlane.xlu0 %1384
    %v1386 = vsel %vm144, %v1382, 0.0
    %1387 = vadd.xlane.f32.xlu0 %v1386
    %v1388 = vpop.xlane.xlu0 %1387
    %v1389 = vmul.f32 %v1385, %v1187
    %v1390 = vmul.f32 %v1388, %v1187
    %v1391 = vsub.f32 %v1381, %v1389
    %v1392 = vsub.f32 %v1382, %v1390
    %v1393 = vmul.f32 %v1391, %v1391
    %v1394 = vmul.f32 %v1392, %v1392
    %v1395 = vsel %vm144, %v1393, 0.0
    %1396 = vadd.xlane.f32.xlu0 %v1395
    %v1397 = vpop.xlane.xlu0 %1396
    %v1398 = vsel %vm144, %v1394, 0.0
    %1399 = vadd.xlane.f32.xlu0 %v1398
    %v1400 = vpop.xlane.xlu0 %1399
    %v1401 = vmul.f32 %v1397, %v1187
    %v1402 = vmul.f32 %v1400, %v1187
    %v1403 = vadd.f32 %v1401, 1e-05
    %v1404 = vadd.f32 %v1402, 1e-05
    %v1405 = vrsqrt.pop %v1403
    %v1406 = vrsqrt.pop %v1404
    %v1407 = vmul.f32 %v1391, %v1405
    %v1408 = vmul.f32 %v1392, %v1406
    %v1409 = vld [vmem:[%s11] sm:$0x1]
    %v1411 = vlaneseq
    %v1412 = vshrl.u32 %v1411, 7
    %v1413 = vsub.s32 0, %v1412
    %v1414 = vrot.slane %v1409, %v1413
    %v1416 = vmul.f32 %v1407, %v1414
    %v1417 = vmul.f32 %v1408, %v1414
    %v1418 = vld [vmem:[%s12] sm:$0x1]
    %v1420 = vlaneseq
    %v1421 = vshrl.u32 %v1420, 7
    %v1422 = vsub.s32 0, %v1421
    %v1423 = vrot.slane %v1418, %v1422
    %v1425 = vadd.f32 %v1416, %v1423
    %v1426 = vadd.f32 %v1417, %v1423
    %1427 = vst.msk [vmem:[#allocation13] sm:$0xff] %vm144, %v1425
    %1428 = vst.msk [vmem:[#allocation13 + $0x8] sm:$0xff] %vm144, %v1426
    // Predicated region
    $region78: #{tpu_custom_call.1} parent=1 // pred_check
      _
    $region79: #{tpu_custom_call.1} parent=1 // pred_check_branch
      %1430 = sbr.rel (0) target = $region81
    $region80: #{tpu_custom_call.1} parent=1 // pred_region
      %s1432 = ssub.s32 256, 256
      %1433 = vsyncadd [#allocation4], %s1432
      %s1434 = sshll.u32 [#allocation13], 4
      %s1435 = int_to_ptr.vmem [resolvable:$true] %s1434
      %1440 = dma.vmem_to_hbm [thread:$0]  %s1435, 256, %s13, [#allocation4], 128, 128, 8
    $region81: #{tpu_custom_call.1} parent=1 // pred_fallthru
      _
    // Predicated region
    $region82: #{tpu_custom_call.1} parent=1 // pred_check
      _
    $region83: #{tpu_custom_call.1} parent=1 // pred_check_branch
      %1442 = sbr.rel (0) target = $region85
    $region84: #{tpu_custom_call.1} parent=1 // pred_region
      %1443 = dma.done [#allocation4], 256
    $region85: #{tpu_custom_call.1} parent=1 // pred_fallthru
      _
    %1444 = vsyncpa [#allocation3], 1
    %1445 = vsyncpa [#allocation6], 1
    %1446 = vsyncpa [#allocation9], 1
    %1447 = vsyncpa [#allocation12], 1
    %1448 = vsyncpa [#allocation4], 1

</llo_original>
